<compile_context>
chip_gen: v6e
topology: v6e:2x2x1
jax: 0.10.0
libtpu: 0.0.40
codegen_flags: <defaults>
</compile_context>

<pallas_src>
import functools

import jax
import jax.numpy as jnp
from jax.experimental import pallas as pl
from jax.experimental.pallas import tpu as pltpu


# ----------------------------- Pallas kernel --------------------------------
def _gru_disc_kernel(x_ref, h0_ref, wih_ref, whh_ref, bi_ref, bhn_ref,
                     fcw_ref, fcb_ref, out_ref, *, seq, batch):
    """Whole forward pass in one kernel invocation.

    x_ref   : (seq*batch, in_feat)   all time steps, flattened over time  (f32)
    h0_ref  : (batch, Hp)            initial hidden state, lane-padded    (f32)
    wih_ref : (in_feat, 3*Hp)        W_ih^T, gate order r, z, n (PyTorch) (f32)
    whh_ref : (Hp, 3*Hp)             W_hh^T                               (bf16)
    bi_ref  : (1, 3*Hp)              [b_ir+b_hr, b_iz+b_hz, b_in]         (f32)
    bhn_ref : (1, Hp)                b_hn (kept separate: multiplied by r)
    fcw_ref : (1, Hp)                FC weight (lane-padded)
    fcb_ref : (1, 1)                 FC bias
    out_ref : (batch, 1)             sigmoid(FC(h_n))
    """
    hp = h0_ref.shape[1]
    in_feat = x_ref.shape[1]
    n_rows = seq * batch

    # ---- input projection for ALL timesteps (no recurrence dependence) -----
    # Bias broadcast hoisted; for tiny in_feat use a VPU outer product instead
    # of a K=in_feat MXU contraction (which would be padded to K=128).
    gi_all = jnp.broadcast_to(bi_ref[...], (n_rows, 3 * hp))
    if in_feat <= 8:
        x = x_ref[...]
        wih = wih_ref[...]
        for f in range(in_feat):
            gi_all = gi_all + x[:, f:f + 1] * wih[f:f + 1, :]
    else:
        gi_all = gi_all + jnp.dot(x_ref[...], wih_ref[...],
                                  preferred_element_type=jnp.float32)

    whh = whh_ref[...]                                        # bf16, loop-invariant
    bhn_b = jnp.broadcast_to(bhn_ref[...], (batch, hp))       # hoisted broadcast

    def step(gi, h):
        # bf16 operands, f32 accumulation; h stays f32 across steps.
        gh = jnp.dot(h.astype(whh.dtype), whh,
                     preferred_element_type=jnp.float32)
        r = jax.nn.sigmoid(gi[:, :hp] + gh[:, :hp])
        z = jax.nn.sigmoid(gi[:, hp:2 * hp] + gh[:, hp:2 * hp])
        n = jnp.tanh(gi[:, 2 * hp:] + r * (gh[:, 2 * hp:] + bhn_b))
        return (1.0 - z) * n + z * h

    h = h0_ref[...]
    if seq <= 64:
        # Full unroll: seq is static and small; LLO sees the whole recurrence.
        for t in range(seq):
            h = step(gi_all[t * batch:(t + 1) * batch, :], h)
    else:
        gi3 = gi_all.reshape(seq, batch, 3 * hp)

        def body(t, h_c):
            return step(gi3[t], h_c)

        h = jax.lax.fori_loop(0, seq, body, h, unroll=4)

    # FC + sigmoid: VPU multiply + lane reduce (avoid an N=1 MXU matmul).
    fc = jnp.sum(h * fcw_ref[...], axis=-1, keepdims=True) + fcb_ref[...]
    out_ref[...] = jax.nn.sigmoid(fc)


# --------------------------- one-time param prep ------------------------------
def _pad_axis(a, axis, new_size):
    pad = [(0, 0)] * a.ndim
    pad[axis] = (0, new_size - a.shape[axis])
    return jnp.pad(a, pad)


def prepare_discriminator_params(params, *, in_feat, hidden):
    """Pad / transpose / pre-combine weights ONCE (not per forward call)."""
    hp = ((hidden + 127) // 128) * 128                  # lane-aligned gate width

    w_ih = _pad_axis(params["w_ih"].reshape(3, hidden, in_feat), 1, hp)
    wih_t = jnp.transpose(w_ih, (2, 0, 1)).reshape(in_feat, 3 * hp)

    w_hh = _pad_axis(_pad_axis(params["w_hh"].reshape(3, hidden, hidden),
                               1, hp), 2, hp)
    whh_t = jnp.transpose(w_hh, (2, 0, 1)).reshape(hp, 3 * hp)
    whh_t = whh_t.astype(jnp.bfloat16)                  # pre-cast for the MXU

    b_ih = params["b_ih"].reshape(3, hidden)
    b_hh = params["b_hh"].reshape(3, hidden)
    b_i = jnp.stack([b_ih[0] + b_hh[0],                 # r: combined
                     b_ih[1] + b_hh[1],                 # z: combined
                     b_ih[2]], axis=0)                  # n: input bias only
    b_i = _pad_axis(b_i, 1, hp).reshape(1, 3 * hp)
    b_hn = _pad_axis(b_hh[2:3], 1, hp)                  # (1, Hp)

    fcw = _pad_axis(params["fc_w"], 1, hp)              # (1, Hp)
    fcb = params["fc_b"].reshape(1, 1)

    return {"wih_t": wih_t, "whh_t": whh_t, "b_i": b_i, "b_hn": b_hn,
            "fcw": fcw, "fcb": fcb, "hp": hp}


# ------------------------------ Python wrapper -------------------------------
def discriminator_forward(gru_input, gru_h0, prepped):
    """gru_input: [seq, batch, in_feat]; gru_h0: [num_layers(=1), batch, hidden].
    Returns [batch, 1] like the PyTorch module."""
    seq, batch, in_feat = gru_input.shape
    hp = prepped["hp"]

    # Pad batch to a multiple of 8 so per-step slices stay sublane-tile aligned.
    batch_p = max(8, ((batch + 7) // 8) * 8)
    x = gru_input
    h0 = gru_h0[0]
    if batch_p != batch:
        x = jnp.pad(x, ((0, 0), (0, batch_p - batch), (0, 0)))
        h0 = jnp.pad(h0, ((0, batch_p - batch), (0, 0)))

    h0p = _pad_axis(h0, 1, hp)                          # (batch_p, Hp), pads = 0
    x2d = x.reshape(seq * batch_p, in_feat)

    kernel = functools.partial(_gru_disc_kernel, seq=seq, batch=batch_p)
    vmem = pl.BlockSpec(memory_space=pltpu.MemorySpace.VMEM)

    out = pl.pallas_call(
        kernel,
        out_shape=jax.ShapeDtypeStruct((batch_p, 1), jnp.float32),
        in_specs=[vmem] * 8,
        out_specs=vmem,
    )(x2d, h0p, prepped["wih_t"], prepped["whh_t"], prepped["b_i"],
      prepped["b_hn"], prepped["fcw"], prepped["fcb"])
    return out[:batch]


# -------------------------- pure-JAX reference -------------------------------
def discriminator_reference(gru_input, gru_h0, params):
    seq, batch, _ = gru_input.shape
    H = gru_h0.shape[-1]
    h = gru_h0[0]
    for t in range(seq):
        x = gru_input[t]
        gi = x @ params["w_ih"].T + params["b_ih"]
        gh = h @ params["w_hh"].T + params["b_hh"]
        i_r, i_z, i_n = gi[:, :H], gi[:, H:2 * H], gi[:, 2 * H:]
        h_r, h_z, h_n = gh[:, :H], gh[:, H:2 * H], gh[:, 2 * H:]
        r = jax.nn.sigmoid(i_r + h_r)
        z = jax.nn.sigmoid(i_z + h_z)
        n = jnp.tanh(i_n + r * h_n)
        h = (1.0 - z) * n + z * h
    fc = h @ params["fc_w"].T + params["fc_b"]
    return jax.nn.sigmoid(fc)


# ---------------------------------- main --------------------------------------
if __name__ == "__main__":
    # Module hyperparameters (defaults of Discriminator_net)
    GRU_INPUT = 2
    GRU_HIDDEN = 40
    GRU_LAYERS = 1

    # Small example shapes: seq=12 (as in the docstring), batch=8
    SEQ, BATCH = 12, 8

    key = jax.random.PRNGKey(0)
    ks = jax.random.split(key, 8)

    # Deterministic PyTorch-style init: U(-1/sqrt(H), 1/sqrt(H))
    bound = 1.0 / (GRU_HIDDEN ** 0.5)
    u = lambda k, shape: jax.random.uniform(k, shape, jnp.float32, -bound, bound)

    params = {
        "w_ih": u(ks[0], (3 * GRU_HIDDEN, GRU_INPUT)),   # weight_ih_l0
        "w_hh": u(ks[1], (3 * GRU_HIDDEN, GRU_HIDDEN)),  # weight_hh_l0
        "b_ih": u(ks[2], (3 * GRU_HIDDEN,)),
        "b_hh": u(ks[3], (3 * GRU_HIDDEN,)),
        "fc_w": u(ks[4], (1, GRU_HIDDEN * GRU_LAYERS)),  # nn.Linear(40, 1)
        "fc_b": u(ks[5], (1,)),
    }

    gru_input = jax.random.normal(ks[6], (SEQ, BATCH, GRU_INPUT), jnp.float32)
    gru_h0 = jax.random.normal(ks[7], (GRU_LAYERS, BATCH, GRU_HIDDEN), jnp.float32)

    # One-time weight layout prep (padding / transpose / bias fusion / bf16 cast).
    prepped = prepare_discriminator_params(params, in_feat=GRU_INPUT,
                                           hidden=GRU_HIDDEN)

    out = discriminator_forward(gru_input, gru_h0, prepped)
    out = jax.block_until_ready(out)

    ref = discriminator_reference(gru_input, gru_h0, params)
    assert out.shape == (BATCH, 1), out.shape
    # Tolerance loosened for the bf16 recurrent-matmul operands (f32 accumulate).
    assert jnp.allclose(out, ref, atol=2e-2, rtol=2e-2), (out, ref)

    print("KERNEL_OK")
</pallas_src>

<mosaic_0001>
module attributes {stable_mosaic.version = 11 : i64} {
  func.func @_gru_disc_kernel(%arg0: memref<96x2xf32, #tpu.memory_space<vmem>>, %arg1: memref<8x128xf32, #tpu.memory_space<vmem>>, %arg2: memref<2x384xf32, #tpu.memory_space<vmem>>, %arg3: memref<128x384xbf16, #tpu.memory_space<vmem>>, %arg4: memref<1x384xf32, #tpu.memory_space<vmem>>, %arg5: memref<1x128xf32, #tpu.memory_space<vmem>>, %arg6: memref<1x128xf32, #tpu.memory_space<vmem>>, %arg7: memref<1x1xf32, #tpu.memory_space<vmem>>, %arg8: memref<8x1xf32, #tpu.memory_space<vmem>>) attributes {dimension_semantics = [], scalar_prefetch = 0 : i64, scratch_operands = 0 : i64, tpu.core_type = #tpu.core_type<tc>} {
    %c0 = arith.constant 0 : index
    %c0_0 = arith.constant 0 : index
    %0 = vector.load %arg4[%c0, %c0_0] : memref<1x384xf32, #tpu.memory_space<vmem>>, vector<1x384xf32>
    %1 = vector.shape_cast %0 : vector<1x384xf32> to vector<1x384xf32>
    %2 = vector.broadcast %1 : vector<1x384xf32> to vector<96x384xf32>
    %c0_1 = arith.constant 0 : index
    %c0_2 = arith.constant 0 : index
    %3 = vector.load %arg0[%c0_1, %c0_2] : memref<96x2xf32, #tpu.memory_space<vmem>>, vector<96x2xf32>
    %c0_3 = arith.constant 0 : index
    %c0_4 = arith.constant 0 : index
    %4 = vector.load %arg2[%c0_3, %c0_4] : memref<2x384xf32, #tpu.memory_space<vmem>>, vector<2x384xf32>
    %5 = vector.extract_strided_slice %3 {offsets = [0, 0], sizes = [96, 1], strides = [1, 1]} : vector<96x2xf32> to vector<96x1xf32>
    %6 = vector.extract_strided_slice %4 {offsets = [0, 0], sizes = [1, 384], strides = [1, 1]} : vector<2x384xf32> to vector<1x384xf32>
    %7 = vector.broadcast %5 : vector<96x1xf32> to vector<96x384xf32>
    %8 = vector.broadcast %6 : vector<1x384xf32> to vector<96x384xf32>
    %9 = arith.mulf %7, %8 : vector<96x384xf32>
    %10 = arith.addf %2, %9 : vector<96x384xf32>
    %11 = vector.extract_strided_slice %3 {offsets = [0, 1], sizes = [96, 1], strides = [1, 1]} : vector<96x2xf32> to vector<96x1xf32>
    %12 = vector.extract_strided_slice %4 {offsets = [1, 0], sizes = [1, 384], strides = [1, 1]} : vector<2x384xf32> to vector<1x384xf32>
    %13 = vector.broadcast %11 : vector<96x1xf32> to vector<96x384xf32>
    %14 = vector.broadcast %12 : vector<1x384xf32> to vector<96x384xf32>
    %15 = arith.mulf %13, %14 : vector<96x384xf32>
    %16 = arith.addf %10, %15 : vector<96x384xf32>
    %c0_5 = arith.constant 0 : index
    %c0_6 = arith.constant 0 : index
    %17 = vector.load %arg3[%c0_5, %c0_6] : memref<128x384xbf16, #tpu.memory_space<vmem>>, vector<128x384xbf16>
    %c0_7 = arith.constant 0 : index
    %c0_8 = arith.constant 0 : index
    %18 = vector.load %arg5[%c0_7, %c0_8] : memref<1x128xf32, #tpu.memory_space<vmem>>, vector<1x128xf32>
    %19 = vector.shape_cast %18 : vector<1x128xf32> to vector<1x128xf32>
    %20 = vector.broadcast %19 : vector<1x128xf32> to vector<8x128xf32>
    %c0_9 = arith.constant 0 : index
    %c0_10 = arith.constant 0 : index
    %21 = vector.load %arg1[%c0_9, %c0_10] : memref<8x128xf32, #tpu.memory_space<vmem>>, vector<8x128xf32>
    %22 = vector.extract_strided_slice %16 {offsets = [0, 0], sizes = [8, 384], strides = [1, 1]} : vector<96x384xf32> to vector<8x384xf32>
    %23 = arith.truncf %21 : vector<8x128xf32> to vector<8x128xbf16>
    %cst = arith.constant dense<0.000000e+00> : vector<8x384xf32>
    %24 = tpu.matmul %23, %17, %cst {dimension_numbers = #tpu.dot_dimension_numbers<[1], [0], [0], [1], [0, 0, 1, 1], [], []>} : vector<8x128xbf16>, vector<128x384xbf16>, vector<8x384xf32> -> vector<8x384xf32>
    %25 = vector.extract_strided_slice %22 {offsets = [0, 0], sizes = [8, 128], strides = [1, 1]} : vector<8x384xf32> to vector<8x128xf32>
    %26 = vector.extract_strided_slice %24 {offsets = [0, 0], sizes = [8, 128], strides = [1, 1]} : vector<8x384xf32> to vector<8x128xf32>
    %27 = arith.addf %25, %26 : vector<8x128xf32>
    %28 = arith.negf %27 : vector<8x128xf32>
    %29 = math.exp %28 : vector<8x128xf32>
    %cst_11 = arith.constant 1.000000e+00 : f32
    %30 = vector.broadcast %cst_11 : f32 to vector<8x128xf32>
    %31 = arith.addf %30, %29 : vector<8x128xf32>
    %32 = arith.divf %30, %31 : vector<8x128xf32>
    %33 = vector.extract_strided_slice %22 {offsets = [0, 128], sizes = [8, 128], strides = [1, 1]} : vector<8x384xf32> to vector<8x128xf32>
    %34 = vector.extract_strided_slice %24 {offsets = [0, 128], sizes = [8, 128], strides = [1, 1]} : vector<8x384xf32> to vector<8x128xf32>
    %35 = arith.addf %33, %34 : vector<8x128xf32>
    %36 = arith.negf %35 : vector<8x128xf32>
    %37 = math.exp %36 : vector<8x128xf32>
    %cst_12 = arith.constant 1.000000e+00 : f32
    %38 = vector.broadcast %cst_12 : f32 to vector<8x128xf32>
    %39 = arith.addf %38, %37 : vector<8x128xf32>
    %40 = arith.divf %38, %39 : vector<8x128xf32>
    %41 = vector.extract_strided_slice %22 {offsets = [0, 256], sizes = [8, 128], strides = [1, 1]} : vector<8x384xf32> to vector<8x128xf32>
    %42 = vector.extract_strided_slice %24 {offsets = [0, 256], sizes = [8, 128], strides = [1, 1]} : vector<8x384xf32> to vector<8x128xf32>
    %43 = arith.addf %42, %20 : vector<8x128xf32>
    %44 = arith.mulf %32, %43 : vector<8x128xf32>
    %45 = arith.addf %41, %44 : vector<8x128xf32>
    %46 = math.tanh %45 : vector<8x128xf32>
    %cst_13 = arith.constant 1.000000e+00 : f32
    %47 = vector.broadcast %cst_13 : f32 to vector<8x128xf32>
    %48 = arith.subf %47, %40 : vector<8x128xf32>
    %49 = arith.mulf %48, %46 : vector<8x128xf32>
    %50 = arith.mulf %40, %21 : vector<8x128xf32>
    %51 = arith.addf %49, %50 : vector<8x128xf32>
    %52 = vector.extract_strided_slice %16 {offsets = [8, 0], sizes = [8, 384], strides = [1, 1]} : vector<96x384xf32> to vector<8x384xf32>
    %53 = arith.truncf %51 : vector<8x128xf32> to vector<8x128xbf16>
    %cst_14 = arith.constant dense<0.000000e+00> : vector<8x384xf32>
    %54 = tpu.matmul %53, %17, %cst_14 {dimension_numbers = #tpu.dot_dimension_numbers<[1], [0], [0], [1], [0, 0, 1, 1], [], []>} : vector<8x128xbf16>, vector<128x384xbf16>, vector<8x384xf32> -> vector<8x384xf32>
    %55 = vector.extract_strided_slice %52 {offsets = [0, 0], sizes = [8, 128], strides = [1, 1]} : vector<8x384xf32> to vector<8x128xf32>
    %56 = vector.extract_strided_slice %54 {offsets = [0, 0], sizes = [8, 128], strides = [1, 1]} : vector<8x384xf32> to vector<8x128xf32>
    %57 = arith.addf %55, %56 : vector<8x128xf32>
    %58 = arith.negf %57 : vector<8x128xf32>
    %59 = math.exp %58 : vector<8x128xf32>
    %cst_15 = arith.constant 1.000000e+00 : f32
    %60 = vector.broadcast %cst_15 : f32 to vector<8x128xf32>
    %61 = arith.addf %60, %59 : vector<8x128xf32>
    %62 = arith.divf %60, %61 : vector<8x128xf32>
    %63 = vector.extract_strided_slice %52 {offsets = [0, 128], sizes = [8, 128], strides = [1, 1]} : vector<8x384xf32> to vector<8x128xf32>
    %64 = vector.extract_strided_slice %54 {offsets = [0, 128], sizes = [8, 128], strides = [1, 1]} : vector<8x384xf32> to vector<8x128xf32>
    %65 = arith.addf %63, %64 : vector<8x128xf32>
    %66 = arith.negf %65 : vector<8x128xf32>
    %67 = math.exp %66 : vector<8x128xf32>
    %cst_16 = arith.constant 1.000000e+00 : f32
    %68 = vector.broadcast %cst_16 : f32 to vector<8x128xf32>
    %69 = arith.addf %68, %67 : vector<8x128xf32>
    %70 = arith.divf %68, %69 : vector<8x128xf32>
    %71 = vector.extract_strided_slice %52 {offsets = [0, 256], sizes = [8, 128], strides = [1, 1]} : vector<8x384xf32> to vector<8x128xf32>
    %72 = vector.extract_strided_slice %54 {offsets = [0, 256], sizes = [8, 128], strides = [1, 1]} : vector<8x384xf32> to vector<8x128xf32>
    %73 = arith.addf %72, %20 : vector<8x128xf32>
    %74 = arith.mulf %62, %73 : vector<8x128xf32>
    %75 = arith.addf %71, %74 : vector<8x128xf32>
    %76 = math.tanh %75 : vector<8x128xf32>
    %cst_17 = arith.constant 1.000000e+00 : f32
    %77 = vector.broadcast %cst_17 : f32 to vector<8x128xf32>
    %78 = arith.subf %77, %70 : vector<8x128xf32>
    %79 = arith.mulf %78, %76 : vector<8x128xf32>
    %80 = arith.mulf %70, %51 : vector<8x128xf32>
    %81 = arith.addf %79, %80 : vector<8x128xf32>
    %82 = vector.extract_strided_slice %16 {offsets = [16, 0], sizes = [8, 384], strides = [1, 1]} : vector<96x384xf32> to vector<8x384xf32>
    %83 = arith.truncf %81 : vector<8x128xf32> to vector<8x128xbf16>
    %cst_18 = arith.constant dense<0.000000e+00> : vector<8x384xf32>
    %84 = tpu.matmul %83, %17, %cst_18 {dimension_numbers = #tpu.dot_dimension_numbers<[1], [0], [0], [1], [0, 0, 1, 1], [], []>} : vector<8x128xbf16>, vector<128x384xbf16>, vector<8x384xf32> -> vector<8x384xf32>
    %85 = vector.extract_strided_slice %82 {offsets = [0, 0], sizes = [8, 128], strides = [1, 1]} : vector<8x384xf32> to vector<8x128xf32>
    %86 = vector.extract_strided_slice %84 {offsets = [0, 0], sizes = [8, 128], strides = [1, 1]} : vector<8x384xf32> to vector<8x128xf32>
    %87 = arith.addf %85, %86 : vector<8x128xf32>
    %88 = arith.negf %87 : vector<8x128xf32>
    %89 = math.exp %88 : vector<8x128xf32>
    %cst_19 = arith.constant 1.000000e+00 : f32
    %90 = vector.broadcast %cst_19 : f32 to vector<8x128xf32>
    %91 = arith.addf %90, %89 : vector<8x128xf32>
    %92 = arith.divf %90, %91 : vector<8x128xf32>
    %93 = vector.extract_strided_slice %82 {offsets = [0, 128], sizes = [8, 128], strides = [1, 1]} : vector<8x384xf32> to vector<8x128xf32>
    %94 = vector.extract_strided_slice %84 {offsets = [0, 128], sizes = [8, 128], strides = [1, 1]} : vector<8x384xf32> to vector<8x128xf32>
    %95 = arith.addf %93, %94 : vector<8x128xf32>
    %96 = arith.negf %95 : vector<8x128xf32>
    %97 = math.exp %96 : vector<8x128xf32>
    %cst_20 = arith.constant 1.000000e+00 : f32
    %98 = vector.broadcast %cst_20 : f32 to vector<8x128xf32>
    %99 = arith.addf %98, %97 : vector<8x128xf32>
    %100 = arith.divf %98, %99 : vector<8x128xf32>
    %101 = vector.extract_strided_slice %82 {offsets = [0, 256], sizes = [8, 128], strides = [1, 1]} : vector<8x384xf32> to vector<8x128xf32>
    %102 = vector.extract_strided_slice %84 {offsets = [0, 256], sizes = [8, 128], strides = [1, 1]} : vector<8x384xf32> to vector<8x128xf32>
    %103 = arith.addf %102, %20 : vector<8x128xf32>
    %104 = arith.mulf %92, %103 : vector<8x128xf32>
    %105 = arith.addf %101, %104 : vector<8x128xf32>
    %106 = math.tanh %105 : vector<8x128xf32>
    %cst_21 = arith.constant 1.000000e+00 : f32
    %107 = vector.broadcast %cst_21 : f32 to vector<8x128xf32>
    %108 = arith.subf %107, %100 : vector<8x128xf32>
    %109 = arith.mulf %108, %106 : vector<8x128xf32>
    %110 = arith.mulf %100, %81 : vector<8x128xf32>
    %111 = arith.addf %109, %110 : vector<8x128xf32>
    %112 = vector.extract_strided_slice %16 {offsets = [24, 0], sizes = [8, 384], strides = [1, 1]} : vector<96x384xf32> to vector<8x384xf32>
    %113 = arith.truncf %111 : vector<8x128xf32> to vector<8x128xbf16>
    %cst_22 = arith.constant dense<0.000000e+00> : vector<8x384xf32>
    %114 = tpu.matmul %113, %17, %cst_22 {dimension_numbers = #tpu.dot_dimension_numbers<[1], [0], [0], [1], [0, 0, 1, 1], [], []>} : vector<8x128xbf16>, vector<128x384xbf16>, vector<8x384xf32> -> vector<8x384xf32>
    %115 = vector.extract_strided_slice %112 {offsets = [0, 0], sizes = [8, 128], strides = [1, 1]} : vector<8x384xf32> to vector<8x128xf32>
    %116 = vector.extract_strided_slice %114 {offsets = [0, 0], sizes = [8, 128], strides = [1, 1]} : vector<8x384xf32> to vector<8x128xf32>
    %117 = arith.addf %115, %116 : vector<8x128xf32>
    %118 = arith.negf %117 : vector<8x128xf32>
    %119 = math.exp %118 : vector<8x128xf32>
    %cst_23 = arith.constant 1.000000e+00 : f32
    %120 = vector.broadcast %cst_23 : f32 to vector<8x128xf32>
    %121 = arith.addf %120, %119 : vector<8x128xf32>
    %122 = arith.divf %120, %121 : vector<8x128xf32>
    %123 = vector.extract_strided_slice %112 {offsets = [0, 128], sizes = [8, 128], strides = [1, 1]} : vector<8x384xf32> to vector<8x128xf32>
    %124 = vector.extract_strided_slice %114 {offsets = [0, 128], sizes = [8, 128], strides = [1, 1]} : vector<8x384xf32> to vector<8x128xf32>
    %125 = arith.addf %123, %124 : vector<8x128xf32>
    %126 = arith.negf %125 : vector<8x128xf32>
    %127 = math.exp %126 : vector<8x128xf32>
    %cst_24 = arith.constant 1.000000e+00 : f32
    %128 = vector.broadcast %cst_24 : f32 to vector<8x128xf32>
    %129 = arith.addf %128, %127 : vector<8x128xf32>
    %130 = arith.divf %128, %129 : vector<8x128xf32>
    %131 = vector.extract_strided_slice %112 {offsets = [0, 256], sizes = [8, 128], strides = [1, 1]} : vector<8x384xf32> to vector<8x128xf32>
    %132 = vector.extract_strided_slice %114 {offsets = [0, 256], sizes = [8, 128], strides = [1, 1]} : vector<8x384xf32> to vector<8x128xf32>
    %133 = arith.addf %132, %20 : vector<8x128xf32>
    %134 = arith.mulf %122, %133 : vector<8x128xf32>
    %135 = arith.addf %131, %134 : vector<8x128xf32>
    %136 = math.tanh %135 : vector<8x128xf32>
    %cst_25 = arith.constant 1.000000e+00 : f32
    %137 = vector.broadcast %cst_25 : f32 to vector<8x128xf32>
    %138 = arith.subf %137, %130 : vector<8x128xf32>
    %139 = arith.mulf %138, %136 : vector<8x128xf32>
    %140 = arith.mulf %130, %111 : vector<8x128xf32>
    %141 = arith.addf %139, %140 : vector<8x128xf32>
    %142 = vector.extract_strided_slice %16 {offsets = [32, 0], sizes = [8, 384], strides = [1, 1]} : vector<96x384xf32> to vector<8x384xf32>
    %143 = arith.truncf %141 : vector<8x128xf32> to vector<8x128xbf16>
    %cst_26 = arith.constant dense<0.000000e+00> : vector<8x384xf32>
    %144 = tpu.matmul %143, %17, %cst_26 {dimension_numbers = #tpu.dot_dimension_numbers<[1], [0], [0], [1], [0, 0, 1, 1], [], []>} : vector<8x128xbf16>, vector<128x384xbf16>, vector<8x384xf32> -> vector<8x384xf32>
    %145 = vector.extract_strided_slice %142 {offsets = [0, 0], sizes = [8, 128], strides = [1, 1]} : vector<8x384xf32> to vector<8x128xf32>
    %146 = vector.extract_strided_slice %144 {offsets = [0, 0], sizes = [8, 128], strides = [1, 1]} : vector<8x384xf32> to vector<8x128xf32>
    %147 = arith.addf %145, %146 : vector<8x128xf32>
    %148 = arith.negf %147 : vector<8x128xf32>
    %149 = math.exp %148 : vector<8x128xf32>
    %cst_27 = arith.constant 1.000000e+00 : f32
    %150 = vector.broadcast %cst_27 : f32 to vector<8x128xf32>
    %151 = arith.addf %150, %149 : vector<8x128xf32>
    %152 = arith.divf %150, %151 : vector<8x128xf32>
    %153 = vector.extract_strided_slice %142 {offsets = [0, 128], sizes = [8, 128], strides = [1, 1]} : vector<8x384xf32> to vector<8x128xf32>
    %154 = vector.extract_strided_slice %144 {offsets = [0, 128], sizes = [8, 128], strides = [1, 1]} : vector<8x384xf32> to vector<8x128xf32>
    %155 = arith.addf %153, %154 : vector<8x128xf32>
    %156 = arith.negf %155 : vector<8x128xf32>
    %157 = math.exp %156 : vector<8x128xf32>
    %cst_28 = arith.constant 1.000000e+00 : f32
    %158 = vector.broadcast %cst_28 : f32 to vector<8x128xf32>
    %159 = arith.addf %158, %157 : vector<8x128xf32>
    %160 = arith.divf %158, %159 : vector<8x128xf32>
    %161 = vector.extract_strided_slice %142 {offsets = [0, 256], sizes = [8, 128], strides = [1, 1]} : vector<8x384xf32> to vector<8x128xf32>
    %162 = vector.extract_strided_slice %144 {offsets = [0, 256], sizes = [8, 128], strides = [1, 1]} : vector<8x384xf32> to vector<8x128xf32>
    %163 = arith.addf %162, %20 : vector<8x128xf32>
    %164 = arith.mulf %152, %163 : vector<8x128xf32>
    %165 = arith.addf %161, %164 : vector<8x128xf32>
    %166 = math.tanh %165 : vector<8x128xf32>
    %cst_29 = arith.constant 1.000000e+00 : f32
    %167 = vector.broadcast %cst_29 : f32 to vector<8x128xf32>
    %168 = arith.subf %167, %160 : vector<8x128xf32>
    %169 = arith.mulf %168, %166 : vector<8x128xf32>
    %170 = arith.mulf %160, %141 : vector<8x128xf32>
    %171 = arith.addf %169, %170 : vector<8x128xf32>
    %172 = vector.extract_strided_slice %16 {offsets = [40, 0], sizes = [8, 384], strides = [1, 1]} : vector<96x384xf32> to vector<8x384xf32>
    %173 = arith.truncf %171 : vector<8x128xf32> to vector<8x128xbf16>
    %cst_30 = arith.constant dense<0.000000e+00> : vector<8x384xf32>
    %174 = tpu.matmul %173, %17, %cst_30 {dimension_numbers = #tpu.dot_dimension_numbers<[1], [0], [0], [1], [0, 0, 1, 1], [], []>} : vector<8x128xbf16>, vector<128x384xbf16>, vector<8x384xf32> -> vector<8x384xf32>
    %175 = vector.extract_strided_slice %172 {offsets = [0, 0], sizes = [8, 128], strides = [1, 1]} : vector<8x384xf32> to vector<8x128xf32>
    %176 = vector.extract_strided_slice %174 {offsets = [0, 0], sizes = [8, 128], strides = [1, 1]} : vector<8x384xf32> to vector<8x128xf32>
    %177 = arith.addf %175, %176 : vector<8x128xf32>
    %178 = arith.negf %177 : vector<8x128xf32>
    %179 = math.exp %178 : vector<8x128xf32>
    %cst_31 = arith.constant 1.000000e+00 : f32
    %180 = vector.broadcast %cst_31 : f32 to vector<8x128xf32>
    %181 = arith.addf %180, %179 : vector<8x128xf32>
    %182 = arith.divf %180, %181 : vector<8x128xf32>
    %183 = vector.extract_strided_slice %172 {offsets = [0, 128], sizes = [8, 128], strides = [1, 1]} : vector<8x384xf32> to vector<8x128xf32>
    %184 = vector.extract_strided_slice %174 {offsets = [0, 128], sizes = [8, 128], strides = [1, 1]} : vector<8x384xf32> to vector<8x128xf32>
    %185 = arith.addf %183, %184 : vector<8x128xf32>
    %186 = arith.negf %185 : vector<8x128xf32>
    %187 = math.exp %186 : vector<8x128xf32>
    %cst_32 = arith.constant 1.000000e+00 : f32
    %188 = vector.broadcast %cst_32 : f32 to vector<8x128xf32>
    %189 = arith.addf %188, %187 : vector<8x128xf32>
    %190 = arith.divf %188, %189 : vector<8x128xf32>
    %191 = vector.extract_strided_slice %172 {offsets = [0, 256], sizes = [8, 128], strides = [1, 1]} : vector<8x384xf32> to vector<8x128xf32>
    %192 = vector.extract_strided_slice %174 {offsets = [0, 256], sizes = [8, 128], strides = [1, 1]} : vector<8x384xf32> to vector<8x128xf32>
    %193 = arith.addf %192, %20 : vector<8x128xf32>
    %194 = arith.mulf %182, %193 : vector<8x128xf32>
    %195 = arith.addf %191, %194 : vector<8x128xf32>
    %196 = math.tanh %195 : vector<8x128xf32>
    %cst_33 = arith.constant 1.000000e+00 : f32
    %197 = vector.broadcast %cst_33 : f32 to vector<8x128xf32>
    %198 = arith.subf %197, %190 : vector<8x128xf32>
    %199 = arith.mulf %198, %196 : vector<8x128xf32>
    %200 = arith.mulf %190, %171 : vector<8x128xf32>
    %201 = arith.addf %199, %200 : vector<8x128xf32>
    %202 = vector.extract_strided_slice %16 {offsets = [48, 0], sizes = [8, 384], strides = [1, 1]} : vector<96x384xf32> to vector<8x384xf32>
    %203 = arith.truncf %201 : vector<8x128xf32> to vector<8x128xbf16>
    %cst_34 = arith.constant dense<0.000000e+00> : vector<8x384xf32>
    %204 = tpu.matmul %203, %17, %cst_34 {dimension_numbers = #tpu.dot_dimension_numbers<[1], [0], [0], [1], [0, 0, 1, 1], [], []>} : vector<8x128xbf16>, vector<128x384xbf16>, vector<8x384xf32> -> vector<8x384xf32>
    %205 = vector.extract_strided_slice %202 {offsets = [0, 0], sizes = [8, 128], strides = [1, 1]} : vector<8x384xf32> to vector<8x128xf32>
    %206 = vector.extract_strided_slice %204 {offsets = [0, 0], sizes = [8, 128], strides = [1, 1]} : vector<8x384xf32> to vector<8x128xf32>
    %207 = arith.addf %205, %206 : vector<8x128xf32>
    %208 = arith.negf %207 : vector<8x128xf32>
    %209 = math.exp %208 : vector<8x128xf32>
    %cst_35 = arith.constant 1.000000e+00 : f32
    %210 = vector.broadcast %cst_35 : f32 to vector<8x128xf32>
    %211 = arith.addf %210, %209 : vector<8x128xf32>
    %212 = arith.divf %210, %211 : vector<8x128xf32>
    %213 = vector.extract_strided_slice %202 {offsets = [0, 128], sizes = [8, 128], strides = [1, 1]} : vector<8x384xf32> to vector<8x128xf32>
    %214 = vector.extract_strided_slice %204 {offsets = [0, 128], sizes = [8, 128], strides = [1, 1]} : vector<8x384xf32> to vector<8x128xf32>
    %215 = arith.addf %213, %214 : vector<8x128xf32>
    %216 = arith.negf %215 : vector<8x128xf32>
    %217 = math.exp %216 : vector<8x128xf32>
    %cst_36 = arith.constant 1.000000e+00 : f32
    %218 = vector.broadcast %cst_36 : f32 to vector<8x128xf32>
    %219 = arith.addf %218, %217 : vector<8x128xf32>
    %220 = arith.divf %218, %219 : vector<8x128xf32>
    %221 = vector.extract_strided_slice %202 {offsets = [0, 256], sizes = [8, 128], strides = [1, 1]} : vector<8x384xf32> to vector<8x128xf32>
    %222 = vector.extract_strided_slice %204 {offsets = [0, 256], sizes = [8, 128], strides = [1, 1]} : vector<8x384xf32> to vector<8x128xf32>
    %223 = arith.addf %222, %20 : vector<8x128xf32>
    %224 = arith.mulf %212, %223 : vector<8x128xf32>
    %225 = arith.addf %221, %224 : vector<8x128xf32>
    %226 = math.tanh %225 : vector<8x128xf32>
    %cst_37 = arith.constant 1.000000e+00 : f32
    %227 = vector.broadcast %cst_37 : f32 to vector<8x128xf32>
    %228 = arith.subf %227, %220 : vector<8x128xf32>
    %229 = arith.mulf %228, %226 : vector<8x128xf32>
    %230 = arith.mulf %220, %201 : vector<8x128xf32>
    %231 = arith.addf %229, %230 : vector<8x128xf32>
    %232 = vector.extract_strided_slice %16 {offsets = [56, 0], sizes = [8, 384], strides = [1, 1]} : vector<96x384xf32> to vector<8x384xf32>
    %233 = arith.truncf %231 : vector<8x128xf32> to vector<8x128xbf16>
    %cst_38 = arith.constant dense<0.000000e+00> : vector<8x384xf32>
    %234 = tpu.matmul %233, %17, %cst_38 {dimension_numbers = #tpu.dot_dimension_numbers<[1], [0], [0], [1], [0, 0, 1, 1], [], []>} : vector<8x128xbf16>, vector<128x384xbf16>, vector<8x384xf32> -> vector<8x384xf32>
    %235 = vector.extract_strided_slice %232 {offsets = [0, 0], sizes = [8, 128], strides = [1, 1]} : vector<8x384xf32> to vector<8x128xf32>
    %236 = vector.extract_strided_slice %234 {offsets = [0, 0], sizes = [8, 128], strides = [1, 1]} : vector<8x384xf32> to vector<8x128xf32>
    %237 = arith.addf %235, %236 : vector<8x128xf32>
    %238 = arith.negf %237 : vector<8x128xf32>
    %239 = math.exp %238 : vector<8x128xf32>
    %cst_39 = arith.constant 1.000000e+00 : f32
    %240 = vector.broadcast %cst_39 : f32 to vector<8x128xf32>
    %241 = arith.addf %240, %239 : vector<8x128xf32>
    %242 = arith.divf %240, %241 : vector<8x128xf32>
    %243 = vector.extract_strided_slice %232 {offsets = [0, 128], sizes = [8, 128], strides = [1, 1]} : vector<8x384xf32> to vector<8x128xf32>
    %244 = vector.extract_strided_slice %234 {offsets = [0, 128], sizes = [8, 128], strides = [1, 1]} : vector<8x384xf32> to vector<8x128xf32>
    %245 = arith.addf %243, %244 : vector<8x128xf32>
    %246 = arith.negf %245 : vector<8x128xf32>
    %247 = math.exp %246 : vector<8x128xf32>
    %cst_40 = arith.constant 1.000000e+00 : f32
    %248 = vector.broadcast %cst_40 : f32 to vector<8x128xf32>
    %249 = arith.addf %248, %247 : vector<8x128xf32>
    %250 = arith.divf %248, %249 : vector<8x128xf32>
    %251 = vector.extract_strided_slice %232 {offsets = [0, 256], sizes = [8, 128], strides = [1, 1]} : vector<8x384xf32> to vector<8x128xf32>
    %252 = vector.extract_strided_slice %234 {offsets = [0, 256], sizes = [8, 128], strides = [1, 1]} : vector<8x384xf32> to vector<8x128xf32>
    %253 = arith.addf %252, %20 : vector<8x128xf32>
    %254 = arith.mulf %242, %253 : vector<8x128xf32>
    %255 = arith.addf %251, %254 : vector<8x128xf32>
    %256 = math.tanh %255 : vector<8x128xf32>
    %cst_41 = arith.constant 1.000000e+00 : f32
    %257 = vector.broadcast %cst_41 : f32 to vector<8x128xf32>
    %258 = arith.subf %257, %250 : vector<8x128xf32>
    %259 = arith.mulf %258, %256 : vector<8x128xf32>
    %260 = arith.mulf %250, %231 : vector<8x128xf32>
    %261 = arith.addf %259, %260 : vector<8x128xf32>
    %262 = vector.extract_strided_slice %16 {offsets = [64, 0], sizes = [8, 384], strides = [1, 1]} : vector<96x384xf32> to vector<8x384xf32>
    %263 = arith.truncf %261 : vector<8x128xf32> to vector<8x128xbf16>
    %cst_42 = arith.constant dense<0.000000e+00> : vector<8x384xf32>
    %264 = tpu.matmul %263, %17, %cst_42 {dimension_numbers = #tpu.dot_dimension_numbers<[1], [0], [0], [1], [0, 0, 1, 1], [], []>} : vector<8x128xbf16>, vector<128x384xbf16>, vector<8x384xf32> -> vector<8x384xf32>
    %265 = vector.extract_strided_slice %262 {offsets = [0, 0], sizes = [8, 128], strides = [1, 1]} : vector<8x384xf32> to vector<8x128xf32>
    %266 = vector.extract_strided_slice %264 {offsets = [0, 0], sizes = [8, 128], strides = [1, 1]} : vector<8x384xf32> to vector<8x128xf32>
    %267 = arith.addf %265, %266 : vector<8x128xf32>
    %268 = arith.negf %267 : vector<8x128xf32>
    %269 = math.exp %268 : vector<8x128xf32>
    %cst_43 = arith.constant 1.000000e+00 : f32
    %270 = vector.broadcast %cst_43 : f32 to vector<8x128xf32>
    %271 = arith.addf %270, %269 : vector<8x128xf32>
    %272 = arith.divf %270, %271 : vector<8x128xf32>
    %273 = vector.extract_strided_slice %262 {offsets = [0, 128], sizes = [8, 128], strides = [1, 1]} : vector<8x384xf32> to vector<8x128xf32>
    %274 = vector.extract_strided_slice %264 {offsets = [0, 128], sizes = [8, 128], strides = [1, 1]} : vector<8x384xf32> to vector<8x128xf32>
    %275 = arith.addf %273, %274 : vector<8x128xf32>
    %276 = arith.negf %275 : vector<8x128xf32>
    %277 = math.exp %276 : vector<8x128xf32>
    %cst_44 = arith.constant 1.000000e+00 : f32
    %278 = vector.broadcast %cst_44 : f32 to vector<8x128xf32>
    %279 = arith.addf %278, %277 : vector<8x128xf32>
    %280 = arith.divf %278, %279 : vector<8x128xf32>
    %281 = vector.extract_strided_slice %262 {offsets = [0, 256], sizes = [8, 128], strides = [1, 1]} : vector<8x384xf32> to vector<8x128xf32>
    %282 = vector.extract_strided_slice %264 {offsets = [0, 256], sizes = [8, 128], strides = [1, 1]} : vector<8x384xf32> to vector<8x128xf32>
    %283 = arith.addf %282, %20 : vector<8x128xf32>
    %284 = arith.mulf %272, %283 : vector<8x128xf32>
    %285 = arith.addf %281, %284 : vector<8x128xf32>
    %286 = math.tanh %285 : vector<8x128xf32>
    %cst_45 = arith.constant 1.000000e+00 : f32
    %287 = vector.broadcast %cst_45 : f32 to vector<8x128xf32>
    %288 = arith.subf %287, %280 : vector<8x128xf32>
    %289 = arith.mulf %288, %286 : vector<8x128xf32>
    %290 = arith.mulf %280, %261 : vector<8x128xf32>
    %291 = arith.addf %289, %290 : vector<8x128xf32>
    %292 = vector.extract_strided_slice %16 {offsets = [72, 0], sizes = [8, 384], strides = [1, 1]} : vector<96x384xf32> to vector<8x384xf32>
    %293 = arith.truncf %291 : vector<8x128xf32> to vector<8x128xbf16>
    %cst_46 = arith.constant dense<0.000000e+00> : vector<8x384xf32>
    %294 = tpu.matmul %293, %17, %cst_46 {dimension_numbers = #tpu.dot_dimension_numbers<[1], [0], [0], [1], [0, 0, 1, 1], [], []>} : vector<8x128xbf16>, vector<128x384xbf16>, vector<8x384xf32> -> vector<8x384xf32>
    %295 = vector.extract_strided_slice %292 {offsets = [0, 0], sizes = [8, 128], strides = [1, 1]} : vector<8x384xf32> to vector<8x128xf32>
    %296 = vector.extract_strided_slice %294 {offsets = [0, 0], sizes = [8, 128], strides = [1, 1]} : vector<8x384xf32> to vector<8x128xf32>
    %297 = arith.addf %295, %296 : vector<8x128xf32>
    %298 = arith.negf %297 : vector<8x128xf32>
    %299 = math.exp %298 : vector<8x128xf32>
    %cst_47 = arith.constant 1.000000e+00 : f32
    %300 = vector.broadcast %cst_47 : f32 to vector<8x128xf32>
    %301 = arith.addf %300, %299 : vector<8x128xf32>
    %302 = arith.divf %300, %301 : vector<8x128xf32>
    %303 = vector.extract_strided_slice %292 {offsets = [0, 128], sizes = [8, 128], strides = [1, 1]} : vector<8x384xf32> to vector<8x128xf32>
    %304 = vector.extract_strided_slice %294 {offsets = [0, 128], sizes = [8, 128], strides = [1, 1]} : vector<8x384xf32> to vector<8x128xf32>
    %305 = arith.addf %303, %304 : vector<8x128xf32>
    %306 = arith.negf %305 : vector<8x128xf32>
    %307 = math.exp %306 : vector<8x128xf32>
    %cst_48 = arith.constant 1.000000e+00 : f32
    %308 = vector.broadcast %cst_48 : f32 to vector<8x128xf32>
    %309 = arith.addf %308, %307 : vector<8x128xf32>
    %310 = arith.divf %308, %309 : vector<8x128xf32>
    %311 = vector.extract_strided_slice %292 {offsets = [0, 256], sizes = [8, 128], strides = [1, 1]} : vector<8x384xf32> to vector<8x128xf32>
    %312 = vector.extract_strided_slice %294 {offsets = [0, 256], sizes = [8, 128], strides = [1, 1]} : vector<8x384xf32> to vector<8x128xf32>
    %313 = arith.addf %312, %20 : vector<8x128xf32>
    %314 = arith.mulf %302, %313 : vector<8x128xf32>
    %315 = arith.addf %311, %314 : vector<8x128xf32>
    %316 = math.tanh %315 : vector<8x128xf32>
    %cst_49 = arith.constant 1.000000e+00 : f32
    %317 = vector.broadcast %cst_49 : f32 to vector<8x128xf32>
    %318 = arith.subf %317, %310 : vector<8x128xf32>
    %319 = arith.mulf %318, %316 : vector<8x128xf32>
    %320 = arith.mulf %310, %291 : vector<8x128xf32>
    %321 = arith.addf %319, %320 : vector<8x128xf32>
    %322 = vector.extract_strided_slice %16 {offsets = [80, 0], sizes = [8, 384], strides = [1, 1]} : vector<96x384xf32> to vector<8x384xf32>
    %323 = arith.truncf %321 : vector<8x128xf32> to vector<8x128xbf16>
    %cst_50 = arith.constant dense<0.000000e+00> : vector<8x384xf32>
    %324 = tpu.matmul %323, %17, %cst_50 {dimension_numbers = #tpu.dot_dimension_numbers<[1], [0], [0], [1], [0, 0, 1, 1], [], []>} : vector<8x128xbf16>, vector<128x384xbf16>, vector<8x384xf32> -> vector<8x384xf32>
    %325 = vector.extract_strided_slice %322 {offsets = [0, 0], sizes = [8, 128], strides = [1, 1]} : vector<8x384xf32> to vector<8x128xf32>
    %326 = vector.extract_strided_slice %324 {offsets = [0, 0], sizes = [8, 128], strides = [1, 1]} : vector<8x384xf32> to vector<8x128xf32>
    %327 = arith.addf %325, %326 : vector<8x128xf32>
    %328 = arith.negf %327 : vector<8x128xf32>
    %329 = math.exp %328 : vector<8x128xf32>
    %cst_51 = arith.constant 1.000000e+00 : f32
    %330 = vector.broadcast %cst_51 : f32 to vector<8x128xf32>
    %331 = arith.addf %330, %329 : vector<8x128xf32>
    %332 = arith.divf %330, %331 : vector<8x128xf32>
    %333 = vector.extract_strided_slice %322 {offsets = [0, 128], sizes = [8, 128], strides = [1, 1]} : vector<8x384xf32> to vector<8x128xf32>
    %334 = vector.extract_strided_slice %324 {offsets = [0, 128], sizes = [8, 128], strides = [1, 1]} : vector<8x384xf32> to vector<8x128xf32>
    %335 = arith.addf %333, %334 : vector<8x128xf32>
    %336 = arith.negf %335 : vector<8x128xf32>
    %337 = math.exp %336 : vector<8x128xf32>
    %cst_52 = arith.constant 1.000000e+00 : f32
    %338 = vector.broadcast %cst_52 : f32 to vector<8x128xf32>
    %339 = arith.addf %338, %337 : vector<8x128xf32>
    %340 = arith.divf %338, %339 : vector<8x128xf32>
    %341 = vector.extract_strided_slice %322 {offsets = [0, 256], sizes = [8, 128], strides = [1, 1]} : vector<8x384xf32> to vector<8x128xf32>
    %342 = vector.extract_strided_slice %324 {offsets = [0, 256], sizes = [8, 128], strides = [1, 1]} : vector<8x384xf32> to vector<8x128xf32>
    %343 = arith.addf %342, %20 : vector<8x128xf32>
    %344 = arith.mulf %332, %343 : vector<8x128xf32>
    %345 = arith.addf %341, %344 : vector<8x128xf32>
    %346 = math.tanh %345 : vector<8x128xf32>
    %cst_53 = arith.constant 1.000000e+00 : f32
    %347 = vector.broadcast %cst_53 : f32 to vector<8x128xf32>
    %348 = arith.subf %347, %340 : vector<8x128xf32>
    %349 = arith.mulf %348, %346 : vector<8x128xf32>
    %350 = arith.mulf %340, %321 : vector<8x128xf32>
    %351 = arith.addf %349, %350 : vector<8x128xf32>
    %352 = vector.extract_strided_slice %16 {offsets = [88, 0], sizes = [8, 384], strides = [1, 1]} : vector<96x384xf32> to vector<8x384xf32>
    %353 = arith.truncf %351 : vector<8x128xf32> to vector<8x128xbf16>
    %cst_54 = arith.constant dense<0.000000e+00> : vector<8x384xf32>
    %354 = tpu.matmul %353, %17, %cst_54 {dimension_numbers = #tpu.dot_dimension_numbers<[1], [0], [0], [1], [0, 0, 1, 1], [], []>} : vector<8x128xbf16>, vector<128x384xbf16>, vector<8x384xf32> -> vector<8x384xf32>
    %355 = vector.extract_strided_slice %352 {offsets = [0, 0], sizes = [8, 128], strides = [1, 1]} : vector<8x384xf32> to vector<8x128xf32>
    %356 = vector.extract_strided_slice %354 {offsets = [0, 0], sizes = [8, 128], strides = [1, 1]} : vector<8x384xf32> to vector<8x128xf32>
    %357 = arith.addf %355, %356 : vector<8x128xf32>
    %358 = arith.negf %357 : vector<8x128xf32>
    %359 = math.exp %358 : vector<8x128xf32>
    %cst_55 = arith.constant 1.000000e+00 : f32
    %360 = vector.broadcast %cst_55 : f32 to vector<8x128xf32>
    %361 = arith.addf %360, %359 : vector<8x128xf32>
    %362 = arith.divf %360, %361 : vector<8x128xf32>
    %363 = vector.extract_strided_slice %352 {offsets = [0, 128], sizes = [8, 128], strides = [1, 1]} : vector<8x384xf32> to vector<8x128xf32>
    %364 = vector.extract_strided_slice %354 {offsets = [0, 128], sizes = [8, 128], strides = [1, 1]} : vector<8x384xf32> to vector<8x128xf32>
    %365 = arith.addf %363, %364 : vector<8x128xf32>
    %366 = arith.negf %365 : vector<8x128xf32>
    %367 = math.exp %366 : vector<8x128xf32>
    %cst_56 = arith.constant 1.000000e+00 : f32
    %368 = vector.broadcast %cst_56 : f32 to vector<8x128xf32>
    %369 = arith.addf %368, %367 : vector<8x128xf32>
    %370 = arith.divf %368, %369 : vector<8x128xf32>
    %371 = vector.extract_strided_slice %352 {offsets = [0, 256], sizes = [8, 128], strides = [1, 1]} : vector<8x384xf32> to vector<8x128xf32>
    %372 = vector.extract_strided_slice %354 {offsets = [0, 256], sizes = [8, 128], strides = [1, 1]} : vector<8x384xf32> to vector<8x128xf32>
    %373 = arith.addf %372, %20 : vector<8x128xf32>
    %374 = arith.mulf %362, %373 : vector<8x128xf32>
    %375 = arith.addf %371, %374 : vector<8x128xf32>
    %376 = math.tanh %375 : vector<8x128xf32>
    %cst_57 = arith.constant 1.000000e+00 : f32
    %377 = vector.broadcast %cst_57 : f32 to vector<8x128xf32>
    %378 = arith.subf %377, %370 : vector<8x128xf32>
    %379 = arith.mulf %378, %376 : vector<8x128xf32>
    %380 = arith.mulf %370, %351 : vector<8x128xf32>
    %381 = arith.addf %379, %380 : vector<8x128xf32>
    %c0_58 = arith.constant 0 : index
    %c0_59 = arith.constant 0 : index
    %382 = vector.load %arg6[%c0_58, %c0_59] : memref<1x128xf32, #tpu.memory_space<vmem>>, vector<1x128xf32>
    %383 = vector.broadcast %382 : vector<1x128xf32> to vector<8x128xf32>
    %384 = arith.mulf %381, %383 : vector<8x128xf32>
    %cst_60 = arith.constant dense<0.000000e+00> : vector<8xf32>
    %385 = vector.multi_reduction <add>, %384, %cst_60 [1] : vector<8x128xf32> to vector<8xf32>
    %386 = vector.shape_cast %385 : vector<8xf32> to vector<8x1xf32>
    %c0_61 = arith.constant 0 : index
    %c0_62 = arith.constant 0 : index
    %387 = vector.load %arg7[%c0_61, %c0_62] : memref<1x1xf32, #tpu.memory_space<vmem>>, vector<1x1xf32>
    %388 = vector.broadcast %387 : vector<1x1xf32> to vector<8x1xf32>
    %389 = arith.addf %386, %388 : vector<8x1xf32>
    %390 = arith.negf %389 : vector<8x1xf32>
    %391 = math.exp %390 : vector<8x1xf32>
    %cst_63 = arith.constant 1.000000e+00 : f32
    %392 = vector.broadcast %cst_63 : f32 to vector<8x1xf32>
    %393 = arith.addf %392, %391 : vector<8x1xf32>
    %394 = arith.divf %392, %393 : vector<8x1xf32>
    %c0_64 = arith.constant 0 : index
    %c0_65 = arith.constant 0 : index
    %395 = vector.load %arg8[%c0_64, %c0_65] : memref<8x1xf32, #tpu.memory_space<vmem>>, vector<8x1xf32>
    tpu.vector_store %arg8[%c0_64, %c0_65], %394 {strides = array<i32>} : memref<8x1xf32, #tpu.memory_space<vmem>>, vector<8x1xf32>,
    return
  }
}

</mosaic_0001>

<llo_original>
// kernel: tpu_custom_call.1
$region0: #{tpu_custom_call.1}
  #allocation0 [shape = 'u32[]', space=smem, size = 0x4, offset = 0x4, fixed_abs, tag = 'smem constant byte address 0x4 - core index']
  #allocation1 [shape = 'u32[144,128]{1,0:T(1,128)}', space=vmem, size = 0x12000, scoped, tag = 'internal scratch']
  #allocation2 [shape = 'f32[1,1]{1,0:T(1,128)S(1)}', space=vmem, size = 0x200, scoped, tag = 'scoped memory for tpu_custom_call.1']
  %s0 = inlined_call_operand.vmem [shape: f32[96,2], index: 0, kind: input, shape index: {}]
  %s1 = inlined_call_operand.vmem [shape: f32[8,128], index: 1, kind: input, shape index: {}]
  %s2 = inlined_call_operand.vmem [shape: f32[2,384], index: 2, kind: input, shape index: {}]
  %s3 = inlined_call_operand.hbm [shape: bf16[128,384], index: 3, kind: input, shape index: {}]
  %s4 = inlined_call_operand.vmem [shape: f32[1,384], index: 4, kind: input, shape index: {}]
  %s5 = inlined_call_operand.vmem [shape: f32[1,128], index: 5, kind: input, shape index: {}]
  %s6 = inlined_call_operand.vmem [shape: f32[1,128], index: 6, kind: input, shape index: {}]
  %s7 = inlined_call_operand.<no memory space> [shape: f32[1,1], index: 7, kind: input, shape index: {}]
  %s8 = inlined_call_operand.vmem [shape: f32[8,1], index: 8, kind: output, shape index: {}]
  %s9 = sld [smem:[#allocation0]]
  $region46: #{tpu_custom_call.1} parent=0
    _
  %s11 = ssub.s32 1, %s9
  %s12 = scalar_select 0, %s11, %s9
  %v13 = vstv %s7
  %14 = vst [vmem:[#allocation2] sm:$0x1] %v13
  $region1: #{tpu_custom_call.1} parent=0
    #allocation3 [shape = 'u8[98304]{0}', space=vmem, size = 0x18000, scoped, tag = 'input window, operand 3, single buffered']
    #allocation4 [shape = 's32[1]{0}', space=sflag, size = 0x4, scoped, tag = 'scoped memory for tpu_custom_call.1']
    %15 = vsyncpa [#allocation4], 0
    // Predicated region
    $region2: #{tpu_custom_call.1} parent=1 // pred_check
      _
    $region3: #{tpu_custom_call.1} parent=1 // pred_check_branch
      %17 = sbr.rel (0) target = $region5
    $region4: #{tpu_custom_call.1} parent=1 // pred_region
      _
    $region5: #{tpu_custom_call.1} parent=1 // pred_fallthru
      _
    // Predicated region
    $region6: #{tpu_custom_call.1} parent=1 // pred_check
      _
    $region7: #{tpu_custom_call.1} parent=1 // pred_check_branch
      %19 = sbr.rel (0) target = $region9
    $region8: #{tpu_custom_call.1} parent=1 // pred_region
      _
    $region9: #{tpu_custom_call.1} parent=1 // pred_fallthru
      _
    // Predicated region
    $region10: #{tpu_custom_call.1} parent=1 // pred_check
      _
    $region11: #{tpu_custom_call.1} parent=1 // pred_check_branch
      %21 = sbr.rel (0) target = $region13
    $region12: #{tpu_custom_call.1} parent=1 // pred_region
      _
    $region13: #{tpu_custom_call.1} parent=1 // pred_fallthru
      _
    // Predicated region
    $region14: #{tpu_custom_call.1} parent=1 // pred_check
      _
    $region15: #{tpu_custom_call.1} parent=1 // pred_check_branch
      %23 = sbr.rel (0) target = $region17
    $region16: #{tpu_custom_call.1} parent=1 // pred_region
      %s25 = ssub.s32 3072, 3072
      %26 = vsyncadd [#allocation4], %s25
      %s27 = sshll.u32 [#allocation3], 4
      %s28 = int_to_ptr.vmem [resolvable:$true] %s27
      %33 = dma.hbm_to_vmem [thread:$0]  %s3, 3072, %s28, [#allocation4], 192, 192, 12
    $region17: #{tpu_custom_call.1} parent=1 // pred_fallthru
      _
    // Predicated region
    $region18: #{tpu_custom_call.1} parent=1 // pred_check
      _
    $region19: #{tpu_custom_call.1} parent=1 // pred_check_branch
      %35 = sbr.rel (0) target = $region21
    $region20: #{tpu_custom_call.1} parent=1 // pred_region
      _
    $region21: #{tpu_custom_call.1} parent=1 // pred_fallthru
      _
    // Predicated region
    $region22: #{tpu_custom_call.1} parent=1 // pred_check
      _
    $region23: #{tpu_custom_call.1} parent=1 // pred_check_branch
      %37 = sbr.rel (0) target = $region25
    $region24: #{tpu_custom_call.1} parent=1 // pred_region
      _
    $region25: #{tpu_custom_call.1} parent=1 // pred_fallthru
      _
    // Predicated region
    $region26: #{tpu_custom_call.1} parent=1 // pred_check
      _
    $region27: #{tpu_custom_call.1} parent=1 // pred_check_branch
      %39 = sbr.rel (0) target = $region29
    $region28: #{tpu_custom_call.1} parent=1 // pred_region
      _
    $region29: #{tpu_custom_call.1} parent=1 // pred_fallthru
      _
    // Predicated region
    $region30: #{tpu_custom_call.1} parent=1 // pred_check
      _
    $region31: #{tpu_custom_call.1} parent=1 // pred_check_branch
      %41 = sbr.rel (0) target = $region33
    $region32: #{tpu_custom_call.1} parent=1 // pred_region
      _
    $region33: #{tpu_custom_call.1} parent=1 // pred_fallthru
      _
    // Predicated region
    $region34: #{tpu_custom_call.1} parent=1 // pred_check
      _
    $region35: #{tpu_custom_call.1} parent=1 // pred_check_branch
      %43 = sbr.rel (0) target = $region37
    $region36: #{tpu_custom_call.1} parent=1 // pred_region
      %44 = dma.done [#allocation4], 3072
    $region37: #{tpu_custom_call.1} parent=1 // pred_fallthru
      _
    %v46 = vld [vmem:[%s4] sm:$0x7]
    %v48 = vlaneseq
    %v49 = vshrl.u32 %v48, 7
    %v50 = vsub.s32 0, %v49
    %v51 = vrot.slane %v46, %v50
    %v52 = vlaneseq
    %v53 = vshrl.u32 %v52, 7
    %v54 = vsub.s32 1, %v53
    %v55 = vrot.slane %v46, %v54
    %v56 = vlaneseq
    %v57 = vshrl.u32 %v56, 7
    %v58 = vsub.s32 2, %v57
    %v59 = vrot.slane %v46, %v58
    %v63 = vld [vmem:[%s0] sm:$0xff]
    %v64 = vld [vmem:[%s0 + $0x8] sm:$0xff]
    %v65 = vld [vmem:[%s0 + $0x10] sm:$0xff]
    %v66 = vld [vmem:[%s0 + $0x18] sm:$0xff]
    %v67 = vld [vmem:[%s0 + $0x20] sm:$0xff]
    %v68 = vld [vmem:[%s0 + $0x28] sm:$0xff]
    %v69 = vld [vmem:[%s0 + $0x30] sm:$0xff]
    %v70 = vld [vmem:[%s0 + $0x38] sm:$0xff]
    %v71 = vld [vmem:[%s0 + $0x40] sm:$0xff]
    %v72 = vld [vmem:[%s0 + $0x48] sm:$0xff]
    %v73 = vld [vmem:[%s0 + $0x50] sm:$0xff]
    %v74 = vld [vmem:[%s0 + $0x58] sm:$0xff]
    %v75 = vld [vmem:[%s2] sm:$0x3f]
    %77 = vset.pattern.permute.xlu0 0
    %78 = vperm.xlu0 %77, %v63
    %v79 = vpop.permute.xlu0 %78
    %82 = vset.pattern.permute.xlu0 0
    %83 = vperm.xlu0 %82, %v64
    %v84 = vpop.permute.xlu0 %83
    %87 = vset.pattern.permute.xlu0 0
    %88 = vperm.xlu0 %87, %v65
    %v89 = vpop.permute.xlu0 %88
    %92 = vset.pattern.permute.xlu0 0
    %93 = vperm.xlu0 %92, %v66
    %v94 = vpop.permute.xlu0 %93
    %97 = vset.pattern.permute.xlu0 0
    %98 = vperm.xlu0 %97, %v67
    %v99 = vpop.permute.xlu0 %98
    %102 = vset.pattern.permute.xlu0 0
    %103 = vperm.xlu0 %102, %v68
    %v104 = vpop.permute.xlu0 %103
    %107 = vset.pattern.permute.xlu0 0
    %108 = vperm.xlu0 %107, %v69
    %v109 = vpop.permute.xlu0 %108
    %112 = vset.pattern.permute.xlu0 0
    %113 = vperm.xlu0 %112, %v70
    %v114 = vpop.permute.xlu0 %113
    %117 = vset.pattern.permute.xlu0 0
    %118 = vperm.xlu0 %117, %v71
    %v119 = vpop.permute.xlu0 %118
    %122 = vset.pattern.permute.xlu0 0
    %123 = vperm.xlu0 %122, %v72
    %v124 = vpop.permute.xlu0 %123
    %127 = vset.pattern.permute.xlu0 0
    %128 = vperm.xlu0 %127, %v73
    %v129 = vpop.permute.xlu0 %128
    %132 = vset.pattern.permute.xlu0 0
    %133 = vperm.xlu0 %132, %v74
    %v134 = vpop.permute.xlu0 %133
    %v137 = vlaneseq
    %v138 = vshrl.u32 %v137, 7
    %v139 = vsub.s32 0, %v138
    %v140 = vrot.slane %v75, %v139
    %v141 = vlaneseq
    %v142 = vshrl.u32 %v141, 7
    %v143 = vsub.s32 2, %v142
    %v144 = vrot.slane %v75, %v143
    %v145 = vlaneseq
    %v146 = vshrl.u32 %v145, 7
    %v147 = vsub.s32 4, %v146
    %v148 = vrot.slane %v75, %v147
    %v152 = vlaneseq
    %v153 = vshrl.u32 %v152, 7
    %v154 = vsub.s32 0, %v153
    %v155 = vrot.slane %v140, %v154
    %v156 = vlaneseq
    %v157 = vshrl.u32 %v156, 7
    %v158 = vsub.s32 0, %v157
    %v159 = vrot.slane %v144, %v158
    %v160 = vlaneseq
    %v161 = vshrl.u32 %v160, 7
    %v162 = vsub.s32 0, %v161
    %v163 = vrot.slane %v148, %v162
    %v164 = vmul.f32 %v79, %v155
    %v165 = vmul.f32 %v79, %v159
    %v166 = vmul.f32 %v79, %v163
    %v167 = vmul.f32 %v84, %v155
    %v168 = vmul.f32 %v84, %v159
    %v169 = vmul.f32 %v84, %v163
    %v170 = vmul.f32 %v89, %v155
    %v171 = vmul.f32 %v89, %v159
    %v172 = vmul.f32 %v89, %v163
    %v173 = vmul.f32 %v94, %v155
    %v174 = vmul.f32 %v94, %v159
    %v175 = vmul.f32 %v94, %v163
    %v176 = vmul.f32 %v99, %v155
    %v177 = vmul.f32 %v99, %v159
    %v178 = vmul.f32 %v99, %v163
    %v179 = vmul.f32 %v104, %v155
    %v180 = vmul.f32 %v104, %v159
    %v181 = vmul.f32 %v104, %v163
    %v182 = vmul.f32 %v109, %v155
    %v183 = vmul.f32 %v109, %v159
    %v184 = vmul.f32 %v109, %v163
    %v185 = vmul.f32 %v114, %v155
    %v186 = vmul.f32 %v114, %v159
    %v187 = vmul.f32 %v114, %v163
    %v188 = vmul.f32 %v119, %v155
    %v189 = vmul.f32 %v119, %v159
    %v190 = vmul.f32 %v119, %v163
    %v191 = vmul.f32 %v124, %v155
    %v192 = vmul.f32 %v124, %v159
    %v193 = vmul.f32 %v124, %v163
    %v194 = vmul.f32 %v129, %v155
    %v195 = vmul.f32 %v129, %v159
    %v196 = vmul.f32 %v129, %v163
    %v197 = vmul.f32 %v134, %v155
    %v198 = vmul.f32 %v134, %v159
    %v199 = vmul.f32 %v134, %v163
    %v200 = vadd.f32 %v51, %v164
    %v201 = vadd.f32 %v55, %v165
    %v202 = vadd.f32 %v59, %v166
    %v203 = vadd.f32 %v51, %v167
    %v204 = vadd.f32 %v55, %v168
    %v205 = vadd.f32 %v59, %v169
    %v206 = vadd.f32 %v51, %v170
    %v207 = vadd.f32 %v55, %v171
    %v208 = vadd.f32 %v59, %v172
    %v209 = vadd.f32 %v51, %v173
    %v210 = vadd.f32 %v55, %v174
    %v211 = vadd.f32 %v59, %v175
    %v212 = vadd.f32 %v51, %v176
    %v213 = vadd.f32 %v55, %v177
    %v214 = vadd.f32 %v59, %v178
    %v215 = vadd.f32 %v51, %v179
    %v216 = vadd.f32 %v55, %v180
    %v217 = vadd.f32 %v59, %v181
    %v218 = vadd.f32 %v51, %v182
    %v219 = vadd.f32 %v55, %v183
    %v220 = vadd.f32 %v59, %v184
    %v221 = vadd.f32 %v51, %v185
    %v222 = vadd.f32 %v55, %v186
    %v223 = vadd.f32 %v59, %v187
    %v224 = vadd.f32 %v51, %v188
    %v225 = vadd.f32 %v55, %v189
    %v226 = vadd.f32 %v59, %v190
    %v227 = vadd.f32 %v51, %v191
    %v228 = vadd.f32 %v55, %v192
    %v229 = vadd.f32 %v59, %v193
    %v230 = vadd.f32 %v51, %v194
    %v231 = vadd.f32 %v55, %v195
    %v232 = vadd.f32 %v59, %v196
    %v233 = vadd.f32 %v51, %v197
    %v234 = vadd.f32 %v55, %v198
    %v235 = vadd.f32 %v59, %v199
    %236 = vset.pattern.permute.xlu0 1
    %237 = vperm.xlu0 %236, %v63
    %v238 = vpop.permute.xlu0 %237
    %240 = vset.pattern.permute.xlu0 1
    %241 = vperm.xlu0 %240, %v64
    %v242 = vpop.permute.xlu0 %241
    %244 = vset.pattern.permute.xlu0 1
    %245 = vperm.xlu0 %244, %v65
    %v246 = vpop.permute.xlu0 %245
    %248 = vset.pattern.permute.xlu0 1
    %249 = vperm.xlu0 %248, %v66
    %v250 = vpop.permute.xlu0 %249
    %252 = vset.pattern.permute.xlu0 1
    %253 = vperm.xlu0 %252, %v67
    %v254 = vpop.permute.xlu0 %253
    %256 = vset.pattern.permute.xlu0 1
    %257 = vperm.xlu0 %256, %v68
    %v258 = vpop.permute.xlu0 %257
    %260 = vset.pattern.permute.xlu0 1
    %261 = vperm.xlu0 %260, %v69
    %v262 = vpop.permute.xlu0 %261
    %264 = vset.pattern.permute.xlu0 1
    %265 = vperm.xlu0 %264, %v70
    %v266 = vpop.permute.xlu0 %265
    %268 = vset.pattern.permute.xlu0 1
    %269 = vperm.xlu0 %268, %v71
    %v270 = vpop.permute.xlu0 %269
    %272 = vset.pattern.permute.xlu0 1
    %273 = vperm.xlu0 %272, %v72
    %v274 = vpop.permute.xlu0 %273
    %276 = vset.pattern.permute.xlu0 1
    %277 = vperm.xlu0 %276, %v73
    %v278 = vpop.permute.xlu0 %277
    %280 = vset.pattern.permute.xlu0 1
    %281 = vperm.xlu0 %280, %v74
    %v282 = vpop.permute.xlu0 %281
    %v284 = vlaneseq
    %v285 = vshrl.u32 %v284, 7
    %v286 = vsub.s32 1, %v285
    %v287 = vrot.slane %v75, %v286
    %v288 = vlaneseq
    %v289 = vshrl.u32 %v288, 7
    %v290 = vsub.s32 3, %v289
    %v291 = vrot.slane %v75, %v290
    %v292 = vlaneseq
    %v293 = vshrl.u32 %v292, 7
    %v294 = vsub.s32 5, %v293
    %v295 = vrot.slane %v75, %v294
    %v299 = vlaneseq
    %v300 = vshrl.u32 %v299, 7
    %v301 = vsub.s32 1, %v300
    %v302 = vrot.slane %v287, %v301
    %v303 = vlaneseq
    %v304 = vshrl.u32 %v303, 7
    %v305 = vsub.s32 1, %v304
    %v306 = vrot.slane %v291, %v305
    %v307 = vlaneseq
    %v308 = vshrl.u32 %v307, 7
    %v309 = vsub.s32 1, %v308
    %v310 = vrot.slane %v295, %v309
    %v311 = vmul.f32 %v238, %v302
    %v312 = vmul.f32 %v238, %v306
    %v313 = vmul.f32 %v238, %v310
    %v314 = vmul.f32 %v242, %v302
    %v315 = vmul.f32 %v242, %v306
    %v316 = vmul.f32 %v242, %v310
    %v317 = vmul.f32 %v246, %v302
    %v318 = vmul.f32 %v246, %v306
    %v319 = vmul.f32 %v246, %v310
    %v320 = vmul.f32 %v250, %v302
    %v321 = vmul.f32 %v250, %v306
    %v322 = vmul.f32 %v250, %v310
    %v323 = vmul.f32 %v254, %v302
    %v324 = vmul.f32 %v254, %v306
    %v325 = vmul.f32 %v254, %v310
    %v326 = vmul.f32 %v258, %v302
    %v327 = vmul.f32 %v258, %v306
    %v328 = vmul.f32 %v258, %v310
    %v329 = vmul.f32 %v262, %v302
    %v330 = vmul.f32 %v262, %v306
    %v331 = vmul.f32 %v262, %v310
    %v332 = vmul.f32 %v266, %v302
    %v333 = vmul.f32 %v266, %v306
    %v334 = vmul.f32 %v266, %v310
    %v335 = vmul.f32 %v270, %v302
    %v336 = vmul.f32 %v270, %v306
    %v337 = vmul.f32 %v270, %v310
    %v338 = vmul.f32 %v274, %v302
    %v339 = vmul.f32 %v274, %v306
    %v340 = vmul.f32 %v274, %v310
    %v341 = vmul.f32 %v278, %v302
    %v342 = vmul.f32 %v278, %v306
    %v343 = vmul.f32 %v278, %v310
    %v344 = vmul.f32 %v282, %v302
    %v345 = vmul.f32 %v282, %v306
    %v346 = vmul.f32 %v282, %v310
    %v347 = vadd.f32 %v200, %v311
    %v348 = vadd.f32 %v201, %v312
    %v349 = vadd.f32 %v202, %v313
    %v350 = vadd.f32 %v203, %v314
    %v351 = vadd.f32 %v204, %v315
    %v352 = vadd.f32 %v205, %v316
    %v353 = vadd.f32 %v206, %v317
    %v354 = vadd.f32 %v207, %v318
    %v355 = vadd.f32 %v208, %v319
    %v356 = vadd.f32 %v209, %v320
    %v357 = vadd.f32 %v210, %v321
    %v358 = vadd.f32 %v211, %v322
    %v359 = vadd.f32 %v212, %v323
    %v360 = vadd.f32 %v213, %v324
    %v361 = vadd.f32 %v214, %v325
    %v362 = vadd.f32 %v215, %v326
    %v363 = vadd.f32 %v216, %v327
    %v364 = vadd.f32 %v217, %v328
    %v365 = vadd.f32 %v218, %v329
    %v366 = vadd.f32 %v219, %v330
    %v367 = vadd.f32 %v220, %v331
    %v368 = vadd.f32 %v221, %v332
    %v369 = vadd.f32 %v222, %v333
    %v370 = vadd.f32 %v223, %v334
    %v371 = vadd.f32 %v224, %v335
    %v372 = vadd.f32 %v225, %v336
    %v373 = vadd.f32 %v226, %v337
    %v374 = vadd.f32 %v227, %v338
    %v375 = vadd.f32 %v228, %v339
    %v376 = vadd.f32 %v229, %v340
    %v377 = vadd.f32 %v230, %v341
    %v378 = vadd.f32 %v231, %v342
    %v379 = vadd.f32 %v232, %v343
    %v380 = vadd.f32 %v233, %v344
    %v381 = vadd.f32 %v234, %v345
    %v382 = vadd.f32 %v235, %v346
    %v383 = vld [vmem:[#allocation3] sm:$0xff]
    %v384 = vld [vmem:[#allocation3 + $0x8] sm:$0xf]
    %v385 = vld [vmem:[#allocation3 + $0xc] sm:$0xff]
    %v386 = vld [vmem:[#allocation3 + $0x14] sm:$0xf]
    %v387 = vld [vmem:[#allocation3 + $0x18] sm:$0xff]
    %v388 = vld [vmem:[#allocation3 + $0x20] sm:$0xf]
    %v389 = vld [vmem:[#allocation3 + $0x24] sm:$0xff]
    %v390 = vld [vmem:[#allocation3 + $0x2c] sm:$0xf]
    %v391 = vld [vmem:[#allocation3 + $0x30] sm:$0xff]
    %v392 = vld [vmem:[#allocation3 + $0x38] sm:$0xf]
    %v393 = vld [vmem:[#allocation3 + $0x3c] sm:$0xff]
    %v394 = vld [vmem:[#allocation3 + $0x44] sm:$0xf]
    %v395 = vld [vmem:[#allocation3 + $0x48] sm:$0xff]
    %v396 = vld [vmem:[#allocation3 + $0x50] sm:$0xf]
    %v397 = vld [vmem:[#allocation3 + $0x54] sm:$0xff]
    %v398 = vld [vmem:[#allocation3 + $0x5c] sm:$0xf]
    %v399 = vld [vmem:[#allocation3 + $0x60] sm:$0xff]
    %v400 = vld [vmem:[#allocation3 + $0x68] sm:$0xf]
    %v401 = vld [vmem:[#allocation3 + $0x6c] sm:$0xff]
    %v402 = vld [vmem:[#allocation3 + $0x74] sm:$0xf]
    %v403 = vld [vmem:[#allocation3 + $0x78] sm:$0xff]
    %v404 = vld [vmem:[#allocation3 + $0x80] sm:$0xf]
    %v405 = vld [vmem:[#allocation3 + $0x84] sm:$0xff]
    %v406 = vld [vmem:[#allocation3 + $0x8c] sm:$0xf]
    %v407 = vld [vmem:[#allocation3 + $0x90] sm:$0xff]
    %v408 = vld [vmem:[#allocation3 + $0x98] sm:$0xf]
    %v409 = vld [vmem:[#allocation3 + $0x9c] sm:$0xff]
    %v410 = vld [vmem:[#allocation3 + $0xa4] sm:$0xf]
    %v411 = vld [vmem:[#allocation3 + $0xa8] sm:$0xff]
    %v412 = vld [vmem:[#allocation3 + $0xb0] sm:$0xf]
    %v413 = vld [vmem:[#allocation3 + $0xb4] sm:$0xff]
    %v414 = vld [vmem:[#allocation3 + $0xbc] sm:$0xf]
    %v415 = vld [vmem:[%s5] sm:$0x1]
    %v417 = vlaneseq
    %v418 = vshrl.u32 %v417, 7
    %v419 = vsub.s32 0, %v418
    %v420 = vrot.slane %v415, %v419
    %v422 = vld [vmem:[%s1] sm:$0xff]
    %v423 = vpack.c.bf16 %v422, %v422
    %v456 = vunpack.c.l.b16 %v383
    %v457 = vunpack.c.h.b16 %v383
    %v458 = vunpack.c.l.b16 %v384
    %v459 = vunpack.c.l.b16 %v385
    %v460 = vunpack.c.h.b16 %v385
    %v461 = vunpack.c.l.b16 %v386
    %v462 = vunpack.c.l.b16 %v387
    %v463 = vunpack.c.h.b16 %v387
    %v464 = vunpack.c.l.b16 %v388
    %v465 = vunpack.c.l.b16 %v389
    %v466 = vunpack.c.h.b16 %v389
    %v467 = vunpack.c.l.b16 %v390
    %v468 = vunpack.c.l.b16 %v391
    %v469 = vunpack.c.h.b16 %v391
    %v470 = vunpack.c.l.b16 %v392
    %v471 = vunpack.c.l.b16 %v393
    %v472 = vunpack.c.h.b16 %v393
    %v473 = vunpack.c.l.b16 %v394
    %v474 = vunpack.c.l.b16 %v395
    %v475 = vunpack.c.h.b16 %v395
    %v476 = vunpack.c.l.b16 %v396
    %v477 = vunpack.c.l.b16 %v397
    %v478 = vunpack.c.h.b16 %v397
    %v479 = vunpack.c.l.b16 %v398
    %v480 = vunpack.c.l.b16 %v399
    %v481 = vunpack.c.h.b16 %v399
    %v482 = vunpack.c.l.b16 %v400
    %v483 = vunpack.c.l.b16 %v401
    %v484 = vunpack.c.h.b16 %v401
    %v485 = vunpack.c.l.b16 %v402
    %v486 = vunpack.c.l.b16 %v403
    %v487 = vunpack.c.h.b16 %v403
    %v488 = vunpack.c.l.b16 %v404
    %v489 = vunpack.c.l.b16 %v405
    %v490 = vunpack.c.h.b16 %v405
    %v491 = vunpack.c.l.b16 %v406
    %v492 = vunpack.c.l.b16 %v407
    %v493 = vunpack.c.h.b16 %v407
    %v494 = vunpack.c.l.b16 %v408
    %v495 = vunpack.c.l.b16 %v409
    %v496 = vunpack.c.h.b16 %v409
    %v497 = vunpack.c.l.b16 %v410
    %v498 = vunpack.c.l.b16 %v411
    %v499 = vunpack.c.h.b16 %v411
    %v500 = vunpack.c.l.b16 %v412
    %v501 = vunpack.c.l.b16 %v413
    %v502 = vunpack.c.h.b16 %v413
    %v503 = vunpack.c.l.b16 %v414
    %v504 = vpack.c.b16 %v459, %v456
    %v505 = vpack.c.b16 %v460, %v457
    %v506 = vpack.c.b16 %v461, %v458
    %v507 = vpack.c.b16 %v465, %v462
    %v508 = vpack.c.b16 %v466, %v463
    %v509 = vpack.c.b16 %v467, %v464
    %v510 = vpack.c.b16 %v471, %v468
    %v511 = vpack.c.b16 %v472, %v469
    %v512 = vpack.c.b16 %v473, %v470
    %v513 = vpack.c.b16 %v477, %v474
    %v514 = vpack.c.b16 %v478, %v475
    %v515 = vpack.c.b16 %v479, %v476
    %v516 = vpack.c.b16 %v483, %v480
    %v517 = vpack.c.b16 %v484, %v481
    %v518 = vpack.c.b16 %v485, %v482
    %v519 = vpack.c.b16 %v489, %v486
    %v520 = vpack.c.b16 %v490, %v487
    %v521 = vpack.c.b16 %v491, %v488
    %v522 = vpack.c.b16 %v495, %v492
    %v523 = vpack.c.b16 %v496, %v493
    %v524 = vpack.c.b16 %v497, %v494
    %v525 = vpack.c.b16 %v501, %v498
    %v526 = vpack.c.b16 %v502, %v499
    %v527 = vpack.c.b16 %v503, %v500
    %552 = vmatprep.subr.bf16.mxu0 %v526
    %553 = vmatpush1.bf16.msra.mxu0 %v525
    %554 = vmatprep.subr.bf16.mxu0 %v523
    %555 = vmatpush1.bf16.msra.mxu0 %v522
    %556 = vmatprep.subr.bf16.mxu0 %v520
    %557 = vmatpush1.bf16.msra.mxu0 %v519
    %558 = vmatprep.subr.bf16.mxu0 %v517
    %559 = vmatpush1.bf16.msra.mxu0 %v516
    %560 = vmatprep.subr.bf16.mxu0 %v514
    %561 = vmatpush1.bf16.msra.mxu0 %v513
    %562 = vmatprep.subr.bf16.mxu0 %v511
    %563 = vmatpush1.bf16.msra.mxu0 %v510
    %564 = vmatprep.subr.bf16.mxu0 %v508
    %565 = vmatpush1.bf16.msra.mxu0 %v507
    %566 = vmatprep.subr.bf16.mxu0 %v505
    %567 = vmatpush1.bf16.msra.mxu0 %v504
    %568 = vmatprep.subr.bf16.mxu0 0
    %569 = vmatpush2.bf16.msra.mxu0 0
    %570 = vmatprep.subr.bf16.mxu0 0
    %571 = vmatpush2.bf16.msra.mxu0 0
    %572 = vmatprep.subr.bf16.mxu0 0
    %573 = vmatpush2.bf16.msra.mxu0 0
    %574 = vmatprep.subr.bf16.mxu0 0
    %575 = vmatpush2.bf16.msra.mxu0 0
    %576 = vmatprep.subr.bf16.mxu0 0
    %577 = vmatpush2.bf16.msra.mxu0 0
    %578 = vmatprep.subr.bf16.mxu0 0
    %579 = vmatpush2.bf16.msra.mxu0 0
    %580 = vmatprep.subr.bf16.mxu0 0
    %581 = vmatpush2.bf16.msra.mxu0 0
    %582 = vmatprep.subr.bf16.mxu0 0
    %583 = vmatpush2.bf16.msra.mxu0 0
    %584 = vmatprep.mubr.bf16.mxu0 0
    %585 = vmatmul.mubr.bf16.gmra.mxu0 %v423
    %v586 = vpop.f32.mrf.mxu0
    %v587 = vadd.f32 0.0, %v586
    %v588 = vpop.f32.mrf.mxu0
    %v589 = vadd.f32 0.0, %v588
    %v590 = vpop.f32.mrf.mxu0
    %v591 = vpop.f32.mrf.mxu0
    %592 = vdwg.mxu0
    %593 = vmatprep.subr.bf16.mxu0 0
    %594 = vmatpush1.bf16.msra.mxu0 %v527
    %595 = vmatprep.subr.bf16.mxu0 0
    %596 = vmatpush1.bf16.msra.mxu0 %v524
    %597 = vmatprep.subr.bf16.mxu0 0
    %598 = vmatpush1.bf16.msra.mxu0 %v521
    %599 = vmatprep.subr.bf16.mxu0 0
    %600 = vmatpush1.bf16.msra.mxu0 %v518
    %601 = vmatprep.subr.bf16.mxu0 0
    %602 = vmatpush1.bf16.msra.mxu0 %v515
    %603 = vmatprep.subr.bf16.mxu0 0
    %604 = vmatpush1.bf16.msra.mxu0 %v512
    %605 = vmatprep.subr.bf16.mxu0 0
    %606 = vmatpush1.bf16.msra.mxu0 %v509
    %607 = vmatprep.subr.bf16.mxu0 0
    %608 = vmatpush1.bf16.msra.mxu0 %v506
    %609 = vmatprep.subr.bf16.mxu0 0
    %610 = vmatpush2.bf16.msra.mxu0 0
    %611 = vmatprep.subr.bf16.mxu0 0
    %612 = vmatpush2.bf16.msra.mxu0 0
    %613 = vmatprep.subr.bf16.mxu0 0
    %614 = vmatpush2.bf16.msra.mxu0 0
    %615 = vmatprep.subr.bf16.mxu0 0
    %616 = vmatpush2.bf16.msra.mxu0 0
    %617 = vmatprep.subr.bf16.mxu0 0
    %618 = vmatpush2.bf16.msra.mxu0 0
    %619 = vmatprep.subr.bf16.mxu0 0
    %620 = vmatpush2.bf16.msra.mxu0 0
    %621 = vmatprep.subr.bf16.mxu0 0
    %622 = vmatpush2.bf16.msra.mxu0 0
    %623 = vmatprep.subr.bf16.mxu0 0
    %624 = vmatpush2.bf16.msra.mxu0 0
    %625 = vmatprep.mubr.bf16.mxu0 0
    %626 = vmatmul.mubr.bf16.gmra.mxu0 %v423
    %v627 = vpop.f32.mrf.mxu0
    %v628 = vadd.f32 0.0, %v627
    %v629 = vpop.f32.mrf.mxu0
    %v630 = vpop.f32.mrf.mxu0
    %v631 = vpop.f32.mrf.mxu0
    %632 = vdwg.mxu0
    %v633 = vadd.f32 %v347, %v587
    %v634 = vxor.u32 %v633, 2147483648
    %v635 = vmul.f32 %v634, 1.442695
    %v636 = vpow.pop %v635
    %v637 = vadd.f32 %v636, 1.0
    %v638 = vrcp.pop %v637
    %v639 = vmul.f32 1.0, %v638
    %v640 = vadd.f32 %v348, %v589
    %v641 = vxor.u32 %v640, 2147483648
    %v642 = vmul.f32 %v641, 1.442695
    %v643 = vpow.pop %v642
    %v644 = vadd.f32 %v643, 1.0
    %v645 = vrcp.pop %v644
    %v646 = vmul.f32 1.0, %v645
    %v647 = vadd.f32 %v628, %v420
    %v648 = vmul.f32 %v639, %v647
    %v649 = vadd.f32 %v349, %v648
    %v650 = vtanh.pop %v649
    %v651 = vsub.f32 1.0, %v646
    %v652 = vmul.f32 %v651, %v650
    %v653 = vmul.f32 %v646, %v422
    %v654 = vadd.f32 %v652, %v653
    %v655 = vpack.c.bf16 %v654, %v654
    %656 = vmatprep.subr.bf16.mxu0 %v526
    %657 = vmatpush1.bf16.msra.mxu0 %v525
    %658 = vmatprep.subr.bf16.mxu0 %v523
    %659 = vmatpush1.bf16.msra.mxu0 %v522
    %660 = vmatprep.subr.bf16.mxu0 %v520
    %661 = vmatpush1.bf16.msra.mxu0 %v519
    %662 = vmatprep.subr.bf16.mxu0 %v517
    %663 = vmatpush1.bf16.msra.mxu0 %v516
    %664 = vmatprep.subr.bf16.mxu0 %v514
    %665 = vmatpush1.bf16.msra.mxu0 %v513
    %666 = vmatprep.subr.bf16.mxu0 %v511
    %667 = vmatpush1.bf16.msra.mxu0 %v510
    %668 = vmatprep.subr.bf16.mxu0 %v508
    %669 = vmatpush1.bf16.msra.mxu0 %v507
    %670 = vmatprep.subr.bf16.mxu0 %v505
    %671 = vmatpush1.bf16.msra.mxu0 %v504
    %672 = vmatprep.subr.bf16.mxu0 0
    %673 = vmatpush2.bf16.msra.mxu0 0
    %674 = vmatprep.subr.bf16.mxu0 0
    %675 = vmatpush2.bf16.msra.mxu0 0
    %676 = vmatprep.subr.bf16.mxu0 0
    %677 = vmatpush2.bf16.msra.mxu0 0
    %678 = vmatprep.subr.bf16.mxu0 0
    %679 = vmatpush2.bf16.msra.mxu0 0
    %680 = vmatprep.subr.bf16.mxu0 0
    %681 = vmatpush2.bf16.msra.mxu0 0
    %682 = vmatprep.subr.bf16.mxu0 0
    %683 = vmatpush2.bf16.msra.mxu0 0
    %684 = vmatprep.subr.bf16.mxu0 0
    %685 = vmatpush2.bf16.msra.mxu0 0
    %686 = vmatprep.subr.bf16.mxu0 0
    %687 = vmatpush2.bf16.msra.mxu0 0
    %688 = vmatprep.mubr.bf16.mxu0 0
    %689 = vmatmul.mubr.bf16.gmra.mxu0 %v655
    %v690 = vpop.f32.mrf.mxu0
    %v691 = vadd.f32 0.0, %v690
    %v692 = vpop.f32.mrf.mxu0
    %v693 = vadd.f32 0.0, %v692
    %v694 = vpop.f32.mrf.mxu0
    %v695 = vpop.f32.mrf.mxu0
    %696 = vdwg.mxu0
    %697 = vmatprep.subr.bf16.mxu0 0
    %698 = vmatpush1.bf16.msra.mxu0 %v527
    %699 = vmatprep.subr.bf16.mxu0 0
    %700 = vmatpush1.bf16.msra.mxu0 %v524
    %701 = vmatprep.subr.bf16.mxu0 0
    %702 = vmatpush1.bf16.msra.mxu0 %v521
    %703 = vmatprep.subr.bf16.mxu0 0
    %704 = vmatpush1.bf16.msra.mxu0 %v518
    %705 = vmatprep.subr.bf16.mxu0 0
    %706 = vmatpush1.bf16.msra.mxu0 %v515
    %707 = vmatprep.subr.bf16.mxu0 0
    %708 = vmatpush1.bf16.msra.mxu0 %v512
    %709 = vmatprep.subr.bf16.mxu0 0
    %710 = vmatpush1.bf16.msra.mxu0 %v509
    %711 = vmatprep.subr.bf16.mxu0 0
    %712 = vmatpush1.bf16.msra.mxu0 %v506
    %713 = vmatprep.subr.bf16.mxu0 0
    %714 = vmatpush2.bf16.msra.mxu0 0
    %715 = vmatprep.subr.bf16.mxu0 0
    %716 = vmatpush2.bf16.msra.mxu0 0
    %717 = vmatprep.subr.bf16.mxu0 0
    %718 = vmatpush2.bf16.msra.mxu0 0
    %719 = vmatprep.subr.bf16.mxu0 0
    %720 = vmatpush2.bf16.msra.mxu0 0
    %721 = vmatprep.subr.bf16.mxu0 0
    %722 = vmatpush2.bf16.msra.mxu0 0
    %723 = vmatprep.subr.bf16.mxu0 0
    %724 = vmatpush2.bf16.msra.mxu0 0
    %725 = vmatprep.subr.bf16.mxu0 0
    %726 = vmatpush2.bf16.msra.mxu0 0
    %727 = vmatprep.subr.bf16.mxu0 0
    %728 = vmatpush2.bf16.msra.mxu0 0
    %729 = vmatprep.mubr.bf16.mxu0 0
    %730 = vmatmul.mubr.bf16.gmra.mxu0 %v655
    %v731 = vpop.f32.mrf.mxu0
    %v732 = vadd.f32 0.0, %v731
    %v733 = vpop.f32.mrf.mxu0
    %v734 = vpop.f32.mrf.mxu0
    %v735 = vpop.f32.mrf.mxu0
    %736 = vdwg.mxu0
    %v737 = vadd.f32 %v350, %v691
    %v738 = vxor.u32 %v737, 2147483648
    %v739 = vmul.f32 %v738, 1.442695
    %v740 = vpow.pop %v739
    %v741 = vadd.f32 %v740, 1.0
    %v742 = vrcp.pop %v741
    %v743 = vmul.f32 1.0, %v742
    %v744 = vadd.f32 %v351, %v693
    %v745 = vxor.u32 %v744, 2147483648
    %v746 = vmul.f32 %v745, 1.442695
    %v747 = vpow.pop %v746
    %v748 = vadd.f32 %v747, 1.0
    %v749 = vrcp.pop %v748
    %v750 = vmul.f32 1.0, %v749
    %v751 = vadd.f32 %v732, %v420
    %v752 = vmul.f32 %v743, %v751
    %v753 = vadd.f32 %v352, %v752
    %v754 = vtanh.pop %v753
    %v755 = vsub.f32 1.0, %v750
    %v756 = vmul.f32 %v755, %v754
    %v757 = vmul.f32 %v750, %v654
    %v758 = vadd.f32 %v756, %v757
    %v759 = vpack.c.bf16 %v758, %v758
    %760 = vmatprep.subr.bf16.mxu0 %v526
    %761 = vmatpush1.bf16.msra.mxu0 %v525
    %762 = vmatprep.subr.bf16.mxu0 %v523
    %763 = vmatpush1.bf16.msra.mxu0 %v522
    %764 = vmatprep.subr.bf16.mxu0 %v520
    %765 = vmatpush1.bf16.msra.mxu0 %v519
    %766 = vmatprep.subr.bf16.mxu0 %v517
    %767 = vmatpush1.bf16.msra.mxu0 %v516
    %768 = vmatprep.subr.bf16.mxu0 %v514
    %769 = vmatpush1.bf16.msra.mxu0 %v513
    %770 = vmatprep.subr.bf16.mxu0 %v511
    %771 = vmatpush1.bf16.msra.mxu0 %v510
    %772 = vmatprep.subr.bf16.mxu0 %v508
    %773 = vmatpush1.bf16.msra.mxu0 %v507
    %774 = vmatprep.subr.bf16.mxu0 %v505
    %775 = vmatpush1.bf16.msra.mxu0 %v504
    %776 = vmatprep.subr.bf16.mxu0 0
    %777 = vmatpush2.bf16.msra.mxu0 0
    %778 = vmatprep.subr.bf16.mxu0 0
    %779 = vmatpush2.bf16.msra.mxu0 0
    %780 = vmatprep.subr.bf16.mxu0 0
    %781 = vmatpush2.bf16.msra.mxu0 0
    %782 = vmatprep.subr.bf16.mxu0 0
    %783 = vmatpush2.bf16.msra.mxu0 0
    %784 = vmatprep.subr.bf16.mxu0 0
    %785 = vmatpush2.bf16.msra.mxu0 0
    %786 = vmatprep.subr.bf16.mxu0 0
    %787 = vmatpush2.bf16.msra.mxu0 0
    %788 = vmatprep.subr.bf16.mxu0 0
    %789 = vmatpush2.bf16.msra.mxu0 0
    %790 = vmatprep.subr.bf16.mxu0 0
    %791 = vmatpush2.bf16.msra.mxu0 0
    %792 = vmatprep.mubr.bf16.mxu0 0
    %793 = vmatmul.mubr.bf16.gmra.mxu0 %v759
    %v794 = vpop.f32.mrf.mxu0
    %v795 = vadd.f32 0.0, %v794
    %v796 = vpop.f32.mrf.mxu0
    %v797 = vadd.f32 0.0, %v796
    %v798 = vpop.f32.mrf.mxu0
    %v799 = vpop.f32.mrf.mxu0
    %800 = vdwg.mxu0
    %801 = vmatprep.subr.bf16.mxu0 0
    %802 = vmatpush1.bf16.msra.mxu0 %v527
    %803 = vmatprep.subr.bf16.mxu0 0
    %804 = vmatpush1.bf16.msra.mxu0 %v524
    %805 = vmatprep.subr.bf16.mxu0 0
    %806 = vmatpush1.bf16.msra.mxu0 %v521
    %807 = vmatprep.subr.bf16.mxu0 0
    %808 = vmatpush1.bf16.msra.mxu0 %v518
    %809 = vmatprep.subr.bf16.mxu0 0
    %810 = vmatpush1.bf16.msra.mxu0 %v515
    %811 = vmatprep.subr.bf16.mxu0 0
    %812 = vmatpush1.bf16.msra.mxu0 %v512
    %813 = vmatprep.subr.bf16.mxu0 0
    %814 = vmatpush1.bf16.msra.mxu0 %v509
    %815 = vmatprep.subr.bf16.mxu0 0
    %816 = vmatpush1.bf16.msra.mxu0 %v506
    %817 = vmatprep.subr.bf16.mxu0 0
    %818 = vmatpush2.bf16.msra.mxu0 0
    %819 = vmatprep.subr.bf16.mxu0 0
    %820 = vmatpush2.bf16.msra.mxu0 0
    %821 = vmatprep.subr.bf16.mxu0 0
    %822 = vmatpush2.bf16.msra.mxu0 0
    %823 = vmatprep.subr.bf16.mxu0 0
    %824 = vmatpush2.bf16.msra.mxu0 0
    %825 = vmatprep.subr.bf16.mxu0 0
    %826 = vmatpush2.bf16.msra.mxu0 0
    %827 = vmatprep.subr.bf16.mxu0 0
    %828 = vmatpush2.bf16.msra.mxu0 0
    %829 = vmatprep.subr.bf16.mxu0 0
    %830 = vmatpush2.bf16.msra.mxu0 0
    %831 = vmatprep.subr.bf16.mxu0 0
    %832 = vmatpush2.bf16.msra.mxu0 0
    %833 = vmatprep.mubr.bf16.mxu0 0
    %834 = vmatmul.mubr.bf16.gmra.mxu0 %v759
    %v835 = vpop.f32.mrf.mxu0
    %v836 = vadd.f32 0.0, %v835
    %v837 = vpop.f32.mrf.mxu0
    %v838 = vpop.f32.mrf.mxu0
    %v839 = vpop.f32.mrf.mxu0
    %840 = vdwg.mxu0
    %v841 = vadd.f32 %v353, %v795
    %v842 = vxor.u32 %v841, 2147483648
    %v843 = vmul.f32 %v842, 1.442695
    %v844 = vpow.pop %v843
    %v845 = vadd.f32 %v844, 1.0
    %v846 = vrcp.pop %v845
    %v847 = vmul.f32 1.0, %v846
    %v848 = vadd.f32 %v354, %v797
    %v849 = vxor.u32 %v848, 2147483648
    %v850 = vmul.f32 %v849, 1.442695
    %v851 = vpow.pop %v850
    %v852 = vadd.f32 %v851, 1.0
    %v853 = vrcp.pop %v852
    %v854 = vmul.f32 1.0, %v853
    %v855 = vadd.f32 %v836, %v420
    %v856 = vmul.f32 %v847, %v855
    %v857 = vadd.f32 %v355, %v856
    %v858 = vtanh.pop %v857
    %v859 = vsub.f32 1.0, %v854
    %v860 = vmul.f32 %v859, %v858
    %v861 = vmul.f32 %v854, %v758
    %v862 = vadd.f32 %v860, %v861
    %v863 = vpack.c.bf16 %v862, %v862
    %864 = vmatprep.subr.bf16.mxu0 %v526
    %865 = vmatpush1.bf16.msra.mxu0 %v525
    %866 = vmatprep.subr.bf16.mxu0 %v523
    %867 = vmatpush1.bf16.msra.mxu0 %v522
    %868 = vmatprep.subr.bf16.mxu0 %v520
    %869 = vmatpush1.bf16.msra.mxu0 %v519
    %870 = vmatprep.subr.bf16.mxu0 %v517
    %871 = vmatpush1.bf16.msra.mxu0 %v516
    %872 = vmatprep.subr.bf16.mxu0 %v514
    %873 = vmatpush1.bf16.msra.mxu0 %v513
    %874 = vmatprep.subr.bf16.mxu0 %v511
    %875 = vmatpush1.bf16.msra.mxu0 %v510
    %876 = vmatprep.subr.bf16.mxu0 %v508
    %877 = vmatpush1.bf16.msra.mxu0 %v507
    %878 = vmatprep.subr.bf16.mxu0 %v505
    %879 = vmatpush1.bf16.msra.mxu0 %v504
    %880 = vmatprep.subr.bf16.mxu0 0
    %881 = vmatpush2.bf16.msra.mxu0 0
    %882 = vmatprep.subr.bf16.mxu0 0
    %883 = vmatpush2.bf16.msra.mxu0 0
    %884 = vmatprep.subr.bf16.mxu0 0
    %885 = vmatpush2.bf16.msra.mxu0 0
    %886 = vmatprep.subr.bf16.mxu0 0
    %887 = vmatpush2.bf16.msra.mxu0 0
    %888 = vmatprep.subr.bf16.mxu0 0
    %889 = vmatpush2.bf16.msra.mxu0 0
    %890 = vmatprep.subr.bf16.mxu0 0
    %891 = vmatpush2.bf16.msra.mxu0 0
    %892 = vmatprep.subr.bf16.mxu0 0
    %893 = vmatpush2.bf16.msra.mxu0 0
    %894 = vmatprep.subr.bf16.mxu0 0
    %895 = vmatpush2.bf16.msra.mxu0 0
    %896 = vmatprep.mubr.bf16.mxu0 0
    %897 = vmatmul.mubr.bf16.gmra.mxu0 %v863
    %v898 = vpop.f32.mrf.mxu0
    %v899 = vadd.f32 0.0, %v898
    %v900 = vpop.f32.mrf.mxu0
    %v901 = vadd.f32 0.0, %v900
    %v902 = vpop.f32.mrf.mxu0
    %v903 = vpop.f32.mrf.mxu0
    %904 = vdwg.mxu0
    %905 = vmatprep.subr.bf16.mxu0 0
    %906 = vmatpush1.bf16.msra.mxu0 %v527
    %907 = vmatprep.subr.bf16.mxu0 0
    %908 = vmatpush1.bf16.msra.mxu0 %v524
    %909 = vmatprep.subr.bf16.mxu0 0
    %910 = vmatpush1.bf16.msra.mxu0 %v521
    %911 = vmatprep.subr.bf16.mxu0 0
    %912 = vmatpush1.bf16.msra.mxu0 %v518
    %913 = vmatprep.subr.bf16.mxu0 0
    %914 = vmatpush1.bf16.msra.mxu0 %v515
    %915 = vmatprep.subr.bf16.mxu0 0
    %916 = vmatpush1.bf16.msra.mxu0 %v512
    %917 = vmatprep.subr.bf16.mxu0 0
    %918 = vmatpush1.bf16.msra.mxu0 %v509
    %919 = vmatprep.subr.bf16.mxu0 0
    %920 = vmatpush1.bf16.msra.mxu0 %v506
    %921 = vmatprep.subr.bf16.mxu0 0
    %922 = vmatpush2.bf16.msra.mxu0 0
    %923 = vmatprep.subr.bf16.mxu0 0
    %924 = vmatpush2.bf16.msra.mxu0 0
    %925 = vmatprep.subr.bf16.mxu0 0
    %926 = vmatpush2.bf16.msra.mxu0 0
    %927 = vmatprep.subr.bf16.mxu0 0
    %928 = vmatpush2.bf16.msra.mxu0 0
    %929 = vmatprep.subr.bf16.mxu0 0
    %930 = vmatpush2.bf16.msra.mxu0 0
    %931 = vmatprep.subr.bf16.mxu0 0
    %932 = vmatpush2.bf16.msra.mxu0 0
    %933 = vmatprep.subr.bf16.mxu0 0
    %934 = vmatpush2.bf16.msra.mxu0 0
    %935 = vmatprep.subr.bf16.mxu0 0
    %936 = vmatpush2.bf16.msra.mxu0 0
    %937 = vmatprep.mubr.bf16.mxu0 0
    %938 = vmatmul.mubr.bf16.gmra.mxu0 %v863
    %v939 = vpop.f32.mrf.mxu0
    %v940 = vadd.f32 0.0, %v939
    %v941 = vpop.f32.mrf.mxu0
    %v942 = vpop.f32.mrf.mxu0
    %v943 = vpop.f32.mrf.mxu0
    %944 = vdwg.mxu0
    %v945 = vadd.f32 %v356, %v899
    %v946 = vxor.u32 %v945, 2147483648
    %v947 = vmul.f32 %v946, 1.442695
    %v948 = vpow.pop %v947
    %v949 = vadd.f32 %v948, 1.0
    %v950 = vrcp.pop %v949
    %v951 = vmul.f32 1.0, %v950
    %v952 = vadd.f32 %v357, %v901
    %v953 = vxor.u32 %v952, 2147483648
    %v954 = vmul.f32 %v953, 1.442695
    %v955 = vpow.pop %v954
    %v956 = vadd.f32 %v955, 1.0
    %v957 = vrcp.pop %v956
    %v958 = vmul.f32 1.0, %v957
    %v959 = vadd.f32 %v940, %v420
    %v960 = vmul.f32 %v951, %v959
    %v961 = vadd.f32 %v358, %v960
    %v962 = vtanh.pop %v961
    %v963 = vsub.f32 1.0, %v958
    %v964 = vmul.f32 %v963, %v962
    %v965 = vmul.f32 %v958, %v862
    %v966 = vadd.f32 %v964, %v965
    %v967 = vpack.c.bf16 %v966, %v966
    %968 = vmatprep.subr.bf16.mxu0 %v526
    %969 = vmatpush1.bf16.msra.mxu0 %v525
    %970 = vmatprep.subr.bf16.mxu0 %v523
    %971 = vmatpush1.bf16.msra.mxu0 %v522
    %972 = vmatprep.subr.bf16.mxu0 %v520
    %973 = vmatpush1.bf16.msra.mxu0 %v519
    %974 = vmatprep.subr.bf16.mxu0 %v517
    %975 = vmatpush1.bf16.msra.mxu0 %v516
    %976 = vmatprep.subr.bf16.mxu0 %v514
    %977 = vmatpush1.bf16.msra.mxu0 %v513
    %978 = vmatprep.subr.bf16.mxu0 %v511
    %979 = vmatpush1.bf16.msra.mxu0 %v510
    %980 = vmatprep.subr.bf16.mxu0 %v508
    %981 = vmatpush1.bf16.msra.mxu0 %v507
    %982 = vmatprep.subr.bf16.mxu0 %v505
    %983 = vmatpush1.bf16.msra.mxu0 %v504
    %984 = vmatprep.subr.bf16.mxu0 0
    %985 = vmatpush2.bf16.msra.mxu0 0
    %986 = vmatprep.subr.bf16.mxu0 0
    %987 = vmatpush2.bf16.msra.mxu0 0
    %988 = vmatprep.subr.bf16.mxu0 0
    %989 = vmatpush2.bf16.msra.mxu0 0
    %990 = vmatprep.subr.bf16.mxu0 0
    %991 = vmatpush2.bf16.msra.mxu0 0
    %992 = vmatprep.subr.bf16.mxu0 0
    %993 = vmatpush2.bf16.msra.mxu0 0
    %994 = vmatprep.subr.bf16.mxu0 0
    %995 = vmatpush2.bf16.msra.mxu0 0
    %996 = vmatprep.subr.bf16.mxu0 0
    %997 = vmatpush2.bf16.msra.mxu0 0
    %998 = vmatprep.subr.bf16.mxu0 0
    %999 = vmatpush2.bf16.msra.mxu0 0
    %1000 = vmatprep.mubr.bf16.mxu0 0
    %1001 = vmatmul.mubr.bf16.gmra.mxu0 %v967
    %v1002 = vpop.f32.mrf.mxu0
    %v1003 = vadd.f32 0.0, %v1002
    %v1004 = vpop.f32.mrf.mxu0
    %v1005 = vadd.f32 0.0, %v1004
    %v1006 = vpop.f32.mrf.mxu0
    %v1007 = vpop.f32.mrf.mxu0
    %1008 = vdwg.mxu0
    %1009 = vmatprep.subr.bf16.mxu0 0
    %1010 = vmatpush1.bf16.msra.mxu0 %v527
    %1011 = vmatprep.subr.bf16.mxu0 0
    %1012 = vmatpush1.bf16.msra.mxu0 %v524
    %1013 = vmatprep.subr.bf16.mxu0 0
    %1014 = vmatpush1.bf16.msra.mxu0 %v521
    %1015 = vmatprep.subr.bf16.mxu0 0
    %1016 = vmatpush1.bf16.msra.mxu0 %v518
    %1017 = vmatprep.subr.bf16.mxu0 0
    %1018 = vmatpush1.bf16.msra.mxu0 %v515
    %1019 = vmatprep.subr.bf16.mxu0 0
    %1020 = vmatpush1.bf16.msra.mxu0 %v512
    %1021 = vmatprep.subr.bf16.mxu0 0
    %1022 = vmatpush1.bf16.msra.mxu0 %v509
    %1023 = vmatprep.subr.bf16.mxu0 0
    %1024 = vmatpush1.bf16.msra.mxu0 %v506
    %1025 = vmatprep.subr.bf16.mxu0 0
    %1026 = vmatpush2.bf16.msra.mxu0 0
    %1027 = vmatprep.subr.bf16.mxu0 0
    %1028 = vmatpush2.bf16.msra.mxu0 0
    %1029 = vmatprep.subr.bf16.mxu0 0
    %1030 = vmatpush2.bf16.msra.mxu0 0
    %1031 = vmatprep.subr.bf16.mxu0 0
    %1032 = vmatpush2.bf16.msra.mxu0 0
    %1033 = vmatprep.subr.bf16.mxu0 0
    %1034 = vmatpush2.bf16.msra.mxu0 0
    %1035 = vmatprep.subr.bf16.mxu0 0
    %1036 = vmatpush2.bf16.msra.mxu0 0
    %1037 = vmatprep.subr.bf16.mxu0 0
    %1038 = vmatpush2.bf16.msra.mxu0 0
    %1039 = vmatprep.subr.bf16.mxu0 0
    %1040 = vmatpush2.bf16.msra.mxu0 0
    %1041 = vmatprep.mubr.bf16.mxu0 0
    %1042 = vmatmul.mubr.bf16.gmra.mxu0 %v967
    %v1043 = vpop.f32.mrf.mxu0
    %v1044 = vadd.f32 0.0, %v1043
    %v1045 = vpop.f32.mrf.mxu0
    %v1046 = vpop.f32.mrf.mxu0
    %v1047 = vpop.f32.mrf.mxu0
    %1048 = vdwg.mxu0
    %v1049 = vadd.f32 %v359, %v1003
    %v1050 = vxor.u32 %v1049, 2147483648
    %v1051 = vmul.f32 %v1050, 1.442695
    %v1052 = vpow.pop %v1051
    %v1053 = vadd.f32 %v1052, 1.0
    %v1054 = vrcp.pop %v1053
    %v1055 = vmul.f32 1.0, %v1054
    %v1056 = vadd.f32 %v360, %v1005
    %v1057 = vxor.u32 %v1056, 2147483648
    %v1058 = vmul.f32 %v1057, 1.442695
    %v1059 = vpow.pop %v1058
    %v1060 = vadd.f32 %v1059, 1.0
    %v1061 = vrcp.pop %v1060
    %v1062 = vmul.f32 1.0, %v1061
    %v1063 = vadd.f32 %v1044, %v420
    %v1064 = vmul.f32 %v1055, %v1063
    %v1065 = vadd.f32 %v361, %v1064
    %v1066 = vtanh.pop %v1065
    %v1067 = vsub.f32 1.0, %v1062
    %v1068 = vmul.f32 %v1067, %v1066
    %v1069 = vmul.f32 %v1062, %v966
    %v1070 = vadd.f32 %v1068, %v1069
    %v1071 = vpack.c.bf16 %v1070, %v1070
    %1072 = vmatprep.subr.bf16.mxu0 %v526
    %1073 = vmatpush1.bf16.msra.mxu0 %v525
    %1074 = vmatprep.subr.bf16.mxu0 %v523
    %1075 = vmatpush1.bf16.msra.mxu0 %v522
    %1076 = vmatprep.subr.bf16.mxu0 %v520
    %1077 = vmatpush1.bf16.msra.mxu0 %v519
    %1078 = vmatprep.subr.bf16.mxu0 %v517
    %1079 = vmatpush1.bf16.msra.mxu0 %v516
    %1080 = vmatprep.subr.bf16.mxu0 %v514
    %1081 = vmatpush1.bf16.msra.mxu0 %v513
    %1082 = vmatprep.subr.bf16.mxu0 %v511
    %1083 = vmatpush1.bf16.msra.mxu0 %v510
    %1084 = vmatprep.subr.bf16.mxu0 %v508
    %1085 = vmatpush1.bf16.msra.mxu0 %v507
    %1086 = vmatprep.subr.bf16.mxu0 %v505
    %1087 = vmatpush1.bf16.msra.mxu0 %v504
    %1088 = vmatprep.subr.bf16.mxu0 0
    %1089 = vmatpush2.bf16.msra.mxu0 0
    %1090 = vmatprep.subr.bf16.mxu0 0
    %1091 = vmatpush2.bf16.msra.mxu0 0
    %1092 = vmatprep.subr.bf16.mxu0 0
    %1093 = vmatpush2.bf16.msra.mxu0 0
    %1094 = vmatprep.subr.bf16.mxu0 0
    %1095 = vmatpush2.bf16.msra.mxu0 0
    %1096 = vmatprep.subr.bf16.mxu0 0
    %1097 = vmatpush2.bf16.msra.mxu0 0
    %1098 = vmatprep.subr.bf16.mxu0 0
    %1099 = vmatpush2.bf16.msra.mxu0 0
    %1100 = vmatprep.subr.bf16.mxu0 0
    %1101 = vmatpush2.bf16.msra.mxu0 0
    %1102 = vmatprep.subr.bf16.mxu0 0
    %1103 = vmatpush2.bf16.msra.mxu0 0
    %1104 = vmatprep.mubr.bf16.mxu0 0
    %1105 = vmatmul.mubr.bf16.gmra.mxu0 %v1071
    %v1106 = vpop.f32.mrf.mxu0
    %v1107 = vadd.f32 0.0, %v1106
    %v1108 = vpop.f32.mrf.mxu0
    %v1109 = vadd.f32 0.0, %v1108
    %v1110 = vpop.f32.mrf.mxu0
    %v1111 = vpop.f32.mrf.mxu0
    %1112 = vdwg.mxu0
    %1113 = vmatprep.subr.bf16.mxu0 0
    %1114 = vmatpush1.bf16.msra.mxu0 %v527
    %1115 = vmatprep.subr.bf16.mxu0 0
    %1116 = vmatpush1.bf16.msra.mxu0 %v524
    %1117 = vmatprep.subr.bf16.mxu0 0
    %1118 = vmatpush1.bf16.msra.mxu0 %v521
    %1119 = vmatprep.subr.bf16.mxu0 0
    %1120 = vmatpush1.bf16.msra.mxu0 %v518
    %1121 = vmatprep.subr.bf16.mxu0 0
    %1122 = vmatpush1.bf16.msra.mxu0 %v515
    %1123 = vmatprep.subr.bf16.mxu0 0
    %1124 = vmatpush1.bf16.msra.mxu0 %v512
    %1125 = vmatprep.subr.bf16.mxu0 0
    %1126 = vmatpush1.bf16.msra.mxu0 %v509
    %1127 = vmatprep.subr.bf16.mxu0 0
    %1128 = vmatpush1.bf16.msra.mxu0 %v506
    %1129 = vmatprep.subr.bf16.mxu0 0
    %1130 = vmatpush2.bf16.msra.mxu0 0
    %1131 = vmatprep.subr.bf16.mxu0 0
    %1132 = vmatpush2.bf16.msra.mxu0 0
    %1133 = vmatprep.subr.bf16.mxu0 0
    %1134 = vmatpush2.bf16.msra.mxu0 0
    %1135 = vmatprep.subr.bf16.mxu0 0
    %1136 = vmatpush2.bf16.msra.mxu0 0
    %1137 = vmatprep.subr.bf16.mxu0 0
    %1138 = vmatpush2.bf16.msra.mxu0 0
    %1139 = vmatprep.subr.bf16.mxu0 0
    %1140 = vmatpush2.bf16.msra.mxu0 0
    %1141 = vmatprep.subr.bf16.mxu0 0
    %1142 = vmatpush2.bf16.msra.mxu0 0
    %1143 = vmatprep.subr.bf16.mxu0 0
    %1144 = vmatpush2.bf16.msra.mxu0 0
    %1145 = vmatprep.mubr.bf16.mxu0 0
    %1146 = vmatmul.mubr.bf16.gmra.mxu0 %v1071
    %v1147 = vpop.f32.mrf.mxu0
    %v1148 = vadd.f32 0.0, %v1147
    %v1149 = vpop.f32.mrf.mxu0
    %v1150 = vpop.f32.mrf.mxu0
    %v1151 = vpop.f32.mrf.mxu0
    %1152 = vdwg.mxu0
    %v1153 = vadd.f32 %v362, %v1107
    %v1154 = vxor.u32 %v1153, 2147483648
    %v1155 = vmul.f32 %v1154, 1.442695
    %v1156 = vpow.pop %v1155
    %v1157 = vadd.f32 %v1156, 1.0
    %v1158 = vrcp.pop %v1157
    %v1159 = vmul.f32 1.0, %v1158
    %v1160 = vadd.f32 %v363, %v1109
    %v1161 = vxor.u32 %v1160, 2147483648
    %v1162 = vmul.f32 %v1161, 1.442695
    %v1163 = vpow.pop %v1162
    %v1164 = vadd.f32 %v1163, 1.0
    %v1165 = vrcp.pop %v1164
    %v1166 = vmul.f32 1.0, %v1165
    %v1167 = vadd.f32 %v1148, %v420
    %v1168 = vmul.f32 %v1159, %v1167
    %v1169 = vadd.f32 %v364, %v1168
    %v1170 = vtanh.pop %v1169
    %v1171 = vsub.f32 1.0, %v1166
    %v1172 = vmul.f32 %v1171, %v1170
    %v1173 = vmul.f32 %v1166, %v1070
    %v1174 = vadd.f32 %v1172, %v1173
    %v1175 = vpack.c.bf16 %v1174, %v1174
    %1176 = vmatprep.subr.bf16.mxu0 %v526
    %1177 = vmatpush1.bf16.msra.mxu0 %v525
    %1178 = vmatprep.subr.bf16.mxu0 %v523
    %1179 = vmatpush1.bf16.msra.mxu0 %v522
    %1180 = vmatprep.subr.bf16.mxu0 %v520
    %1181 = vmatpush1.bf16.msra.mxu0 %v519
    %1182 = vmatprep.subr.bf16.mxu0 %v517
    %1183 = vmatpush1.bf16.msra.mxu0 %v516
    %1184 = vmatprep.subr.bf16.mxu0 %v514
    %1185 = vmatpush1.bf16.msra.mxu0 %v513
    %1186 = vmatprep.subr.bf16.mxu0 %v511
    %1187 = vmatpush1.bf16.msra.mxu0 %v510
    %1188 = vmatprep.subr.bf16.mxu0 %v508
    %1189 = vmatpush1.bf16.msra.mxu0 %v507
    %1190 = vmatprep.subr.bf16.mxu0 %v505
    %1191 = vmatpush1.bf16.msra.mxu0 %v504
    %1192 = vmatprep.subr.bf16.mxu0 0
    %1193 = vmatpush2.bf16.msra.mxu0 0
    %1194 = vmatprep.subr.bf16.mxu0 0
    %1195 = vmatpush2.bf16.msra.mxu0 0
    %1196 = vmatprep.subr.bf16.mxu0 0
    %1197 = vmatpush2.bf16.msra.mxu0 0
    %1198 = vmatprep.subr.bf16.mxu0 0
    %1199 = vmatpush2.bf16.msra.mxu0 0
    %1200 = vmatprep.subr.bf16.mxu0 0
    %1201 = vmatpush2.bf16.msra.mxu0 0
    %1202 = vmatprep.subr.bf16.mxu0 0
    %1203 = vmatpush2.bf16.msra.mxu0 0
    %1204 = vmatprep.subr.bf16.mxu0 0
    %1205 = vmatpush2.bf16.msra.mxu0 0
    %1206 = vmatprep.subr.bf16.mxu0 0
    %1207 = vmatpush2.bf16.msra.mxu0 0
    %1208 = vmatprep.mubr.bf16.mxu0 0
    %1209 = vmatmul.mubr.bf16.gmra.mxu0 %v1175
    %v1210 = vpop.f32.mrf.mxu0
    %v1211 = vadd.f32 0.0, %v1210
    %v1212 = vpop.f32.mrf.mxu0
    %v1213 = vadd.f32 0.0, %v1212
    %v1214 = vpop.f32.mrf.mxu0
    %v1215 = vpop.f32.mrf.mxu0
    %1216 = vdwg.mxu0
    %1217 = vmatprep.subr.bf16.mxu0 0
    %1218 = vmatpush1.bf16.msra.mxu0 %v527
    %1219 = vmatprep.subr.bf16.mxu0 0
    %1220 = vmatpush1.bf16.msra.mxu0 %v524
    %1221 = vmatprep.subr.bf16.mxu0 0
    %1222 = vmatpush1.bf16.msra.mxu0 %v521
    %1223 = vmatprep.subr.bf16.mxu0 0
    %1224 = vmatpush1.bf16.msra.mxu0 %v518
    %1225 = vmatprep.subr.bf16.mxu0 0
    %1226 = vmatpush1.bf16.msra.mxu0 %v515
    %1227 = vmatprep.subr.bf16.mxu0 0
    %1228 = vmatpush1.bf16.msra.mxu0 %v512
    %1229 = vmatprep.subr.bf16.mxu0 0
    %1230 = vmatpush1.bf16.msra.mxu0 %v509
    %1231 = vmatprep.subr.bf16.mxu0 0
    %1232 = vmatpush1.bf16.msra.mxu0 %v506
    %1233 = vmatprep.subr.bf16.mxu0 0
    %1234 = vmatpush2.bf16.msra.mxu0 0
    %1235 = vmatprep.subr.bf16.mxu0 0
    %1236 = vmatpush2.bf16.msra.mxu0 0
    %1237 = vmatprep.subr.bf16.mxu0 0
    %1238 = vmatpush2.bf16.msra.mxu0 0
    %1239 = vmatprep.subr.bf16.mxu0 0
    %1240 = vmatpush2.bf16.msra.mxu0 0
    %1241 = vmatprep.subr.bf16.mxu0 0
    %1242 = vmatpush2.bf16.msra.mxu0 0
    %1243 = vmatprep.subr.bf16.mxu0 0
    %1244 = vmatpush2.bf16.msra.mxu0 0
    %1245 = vmatprep.subr.bf16.mxu0 0
    %1246 = vmatpush2.bf16.msra.mxu0 0
    %1247 = vmatprep.subr.bf16.mxu0 0
    %1248 = vmatpush2.bf16.msra.mxu0 0
    %1249 = vmatprep.mubr.bf16.mxu0 0
    %1250 = vmatmul.mubr.bf16.gmra.mxu0 %v1175
    %v1251 = vpop.f32.mrf.mxu0
    %v1252 = vadd.f32 0.0, %v1251
    %v1253 = vpop.f32.mrf.mxu0
    %v1254 = vpop.f32.mrf.mxu0
    %v1255 = vpop.f32.mrf.mxu0
    %1256 = vdwg.mxu0
    %v1257 = vadd.f32 %v365, %v1211
    %v1258 = vxor.u32 %v1257, 2147483648
    %v1259 = vmul.f32 %v1258, 1.442695
    %v1260 = vpow.pop %v1259
    %v1261 = vadd.f32 %v1260, 1.0
    %v1262 = vrcp.pop %v1261
    %v1263 = vmul.f32 1.0, %v1262
    %v1264 = vadd.f32 %v366, %v1213
    %v1265 = vxor.u32 %v1264, 2147483648
    %v1266 = vmul.f32 %v1265, 1.442695
    %v1267 = vpow.pop %v1266
    %v1268 = vadd.f32 %v1267, 1.0
    %v1269 = vrcp.pop %v1268
    %v1270 = vmul.f32 1.0, %v1269
    %v1271 = vadd.f32 %v1252, %v420
    %v1272 = vmul.f32 %v1263, %v1271
    %v1273 = vadd.f32 %v367, %v1272
    %v1274 = vtanh.pop %v1273
    %v1275 = vsub.f32 1.0, %v1270
    %v1276 = vmul.f32 %v1275, %v1274
    %v1277 = vmul.f32 %v1270, %v1174
    %v1278 = vadd.f32 %v1276, %v1277
    %v1279 = vpack.c.bf16 %v1278, %v1278
    %1280 = vmatprep.subr.bf16.mxu0 %v526
    %1281 = vmatpush1.bf16.msra.mxu0 %v525
    %1282 = vmatprep.subr.bf16.mxu0 %v523
    %1283 = vmatpush1.bf16.msra.mxu0 %v522
    %1284 = vmatprep.subr.bf16.mxu0 %v520
    %1285 = vmatpush1.bf16.msra.mxu0 %v519
    %1286 = vmatprep.subr.bf16.mxu0 %v517
    %1287 = vmatpush1.bf16.msra.mxu0 %v516
    %1288 = vmatprep.subr.bf16.mxu0 %v514
    %1289 = vmatpush1.bf16.msra.mxu0 %v513
    %1290 = vmatprep.subr.bf16.mxu0 %v511
    %1291 = vmatpush1.bf16.msra.mxu0 %v510
    %1292 = vmatprep.subr.bf16.mxu0 %v508
    %1293 = vmatpush1.bf16.msra.mxu0 %v507
    %1294 = vmatprep.subr.bf16.mxu0 %v505
    %1295 = vmatpush1.bf16.msra.mxu0 %v504
    %1296 = vmatprep.subr.bf16.mxu0 0
    %1297 = vmatpush2.bf16.msra.mxu0 0
    %1298 = vmatprep.subr.bf16.mxu0 0
    %1299 = vmatpush2.bf16.msra.mxu0 0
    %1300 = vmatprep.subr.bf16.mxu0 0
    %1301 = vmatpush2.bf16.msra.mxu0 0
    %1302 = vmatprep.subr.bf16.mxu0 0
    %1303 = vmatpush2.bf16.msra.mxu0 0
    %1304 = vmatprep.subr.bf16.mxu0 0
    %1305 = vmatpush2.bf16.msra.mxu0 0
    %1306 = vmatprep.subr.bf16.mxu0 0
    %1307 = vmatpush2.bf16.msra.mxu0 0
    %1308 = vmatprep.subr.bf16.mxu0 0
    %1309 = vmatpush2.bf16.msra.mxu0 0
    %1310 = vmatprep.subr.bf16.mxu0 0
    %1311 = vmatpush2.bf16.msra.mxu0 0
    %1312 = vmatprep.mubr.bf16.mxu0 0
    %1313 = vmatmul.mubr.bf16.gmra.mxu0 %v1279
    %v1314 = vpop.f32.mrf.mxu0
    %v1315 = vadd.f32 0.0, %v1314
    %v1316 = vpop.f32.mrf.mxu0
    %v1317 = vadd.f32 0.0, %v1316
    %v1318 = vpop.f32.mrf.mxu0
    %v1319 = vpop.f32.mrf.mxu0
    %1320 = vdwg.mxu0
    %1321 = vmatprep.subr.bf16.mxu0 0
    %1322 = vmatpush1.bf16.msra.mxu0 %v527
    %1323 = vmatprep.subr.bf16.mxu0 0
    %1324 = vmatpush1.bf16.msra.mxu0 %v524
    %1325 = vmatprep.subr.bf16.mxu0 0
    %1326 = vmatpush1.bf16.msra.mxu0 %v521
    %1327 = vmatprep.subr.bf16.mxu0 0
    %1328 = vmatpush1.bf16.msra.mxu0 %v518
    %1329 = vmatprep.subr.bf16.mxu0 0
    %1330 = vmatpush1.bf16.msra.mxu0 %v515
    %1331 = vmatprep.subr.bf16.mxu0 0
    %1332 = vmatpush1.bf16.msra.mxu0 %v512
    %1333 = vmatprep.subr.bf16.mxu0 0
    %1334 = vmatpush1.bf16.msra.mxu0 %v509
    %1335 = vmatprep.subr.bf16.mxu0 0
    %1336 = vmatpush1.bf16.msra.mxu0 %v506
    %1337 = vmatprep.subr.bf16.mxu0 0
    %1338 = vmatpush2.bf16.msra.mxu0 0
    %1339 = vmatprep.subr.bf16.mxu0 0
    %1340 = vmatpush2.bf16.msra.mxu0 0
    %1341 = vmatprep.subr.bf16.mxu0 0
    %1342 = vmatpush2.bf16.msra.mxu0 0
    %1343 = vmatprep.subr.bf16.mxu0 0
    %1344 = vmatpush2.bf16.msra.mxu0 0
    %1345 = vmatprep.subr.bf16.mxu0 0
    %1346 = vmatpush2.bf16.msra.mxu0 0
    %1347 = vmatprep.subr.bf16.mxu0 0
    %1348 = vmatpush2.bf16.msra.mxu0 0
    %1349 = vmatprep.subr.bf16.mxu0 0
    %1350 = vmatpush2.bf16.msra.mxu0 0
    %1351 = vmatprep.subr.bf16.mxu0 0
    %1352 = vmatpush2.bf16.msra.mxu0 0
    %1353 = vmatprep.mubr.bf16.mxu0 0
    %1354 = vmatmul.mubr.bf16.gmra.mxu0 %v1279
    %v1355 = vpop.f32.mrf.mxu0
    %v1356 = vadd.f32 0.0, %v1355
    %v1357 = vpop.f32.mrf.mxu0
    %v1358 = vpop.f32.mrf.mxu0
    %v1359 = vpop.f32.mrf.mxu0
    %1360 = vdwg.mxu0
    %v1361 = vadd.f32 %v368, %v1315
    %v1362 = vxor.u32 %v1361, 2147483648
    %v1363 = vmul.f32 %v1362, 1.442695
    %v1364 = vpow.pop %v1363
    %v1365 = vadd.f32 %v1364, 1.0
    %v1366 = vrcp.pop %v1365
    %v1367 = vmul.f32 1.0, %v1366
    %v1368 = vadd.f32 %v369, %v1317
    %v1369 = vxor.u32 %v1368, 2147483648
    %v1370 = vmul.f32 %v1369, 1.442695
    %v1371 = vpow.pop %v1370
    %v1372 = vadd.f32 %v1371, 1.0
    %v1373 = vrcp.pop %v1372
    %v1374 = vmul.f32 1.0, %v1373
    %v1375 = vadd.f32 %v1356, %v420
    %v1376 = vmul.f32 %v1367, %v1375
    %v1377 = vadd.f32 %v370, %v1376
    %v1378 = vtanh.pop %v1377
    %v1379 = vsub.f32 1.0, %v1374
    %v1380 = vmul.f32 %v1379, %v1378
    %v1381 = vmul.f32 %v1374, %v1278
    %v1382 = vadd.f32 %v1380, %v1381
    %v1383 = vpack.c.bf16 %v1382, %v1382
    %1384 = vmatprep.subr.bf16.mxu0 %v526
    %1385 = vmatpush1.bf16.msra.mxu0 %v525
    %1386 = vmatprep.subr.bf16.mxu0 %v523
    %1387 = vmatpush1.bf16.msra.mxu0 %v522
    %1388 = vmatprep.subr.bf16.mxu0 %v520
    %1389 = vmatpush1.bf16.msra.mxu0 %v519
    %1390 = vmatprep.subr.bf16.mxu0 %v517
    %1391 = vmatpush1.bf16.msra.mxu0 %v516
    %1392 = vmatprep.subr.bf16.mxu0 %v514
    %1393 = vmatpush1.bf16.msra.mxu0 %v513
    %1394 = vmatprep.subr.bf16.mxu0 %v511
    %1395 = vmatpush1.bf16.msra.mxu0 %v510
    %1396 = vmatprep.subr.bf16.mxu0 %v508
    %1397 = vmatpush1.bf16.msra.mxu0 %v507
    %1398 = vmatprep.subr.bf16.mxu0 %v505
    %1399 = vmatpush1.bf16.msra.mxu0 %v504
    %1400 = vmatprep.subr.bf16.mxu0 0
    %1401 = vmatpush2.bf16.msra.mxu0 0
    %1402 = vmatprep.subr.bf16.mxu0 0
    %1403 = vmatpush2.bf16.msra.mxu0 0
    %1404 = vmatprep.subr.bf16.mxu0 0
    %1405 = vmatpush2.bf16.msra.mxu0 0
    %1406 = vmatprep.subr.bf16.mxu0 0
    %1407 = vmatpush2.bf16.msra.mxu0 0
    %1408 = vmatprep.subr.bf16.mxu0 0
    %1409 = vmatpush2.bf16.msra.mxu0 0
    %1410 = vmatprep.subr.bf16.mxu0 0
    %1411 = vmatpush2.bf16.msra.mxu0 0
    %1412 = vmatprep.subr.bf16.mxu0 0
    %1413 = vmatpush2.bf16.msra.mxu0 0
    %1414 = vmatprep.subr.bf16.mxu0 0
    %1415 = vmatpush2.bf16.msra.mxu0 0
    %1416 = vmatprep.mubr.bf16.mxu0 0
    %1417 = vmatmul.mubr.bf16.gmra.mxu0 %v1383
    %v1418 = vpop.f32.mrf.mxu0
    %v1419 = vadd.f32 0.0, %v1418
    %v1420 = vpop.f32.mrf.mxu0
    %v1421 = vadd.f32 0.0, %v1420
    %v1422 = vpop.f32.mrf.mxu0
    %v1423 = vpop.f32.mrf.mxu0
    %1424 = vdwg.mxu0
    %1425 = vmatprep.subr.bf16.mxu0 0
    %1426 = vmatpush1.bf16.msra.mxu0 %v527
    %1427 = vmatprep.subr.bf16.mxu0 0
    %1428 = vmatpush1.bf16.msra.mxu0 %v524
    %1429 = vmatprep.subr.bf16.mxu0 0
    %1430 = vmatpush1.bf16.msra.mxu0 %v521
    %1431 = vmatprep.subr.bf16.mxu0 0
    %1432 = vmatpush1.bf16.msra.mxu0 %v518
    %1433 = vmatprep.subr.bf16.mxu0 0
    %1434 = vmatpush1.bf16.msra.mxu0 %v515
    %1435 = vmatprep.subr.bf16.mxu0 0
    %1436 = vmatpush1.bf16.msra.mxu0 %v512
    %1437 = vmatprep.subr.bf16.mxu0 0
    %1438 = vmatpush1.bf16.msra.mxu0 %v509
    %1439 = vmatprep.subr.bf16.mxu0 0
    %1440 = vmatpush1.bf16.msra.mxu0 %v506
    %1441 = vmatprep.subr.bf16.mxu0 0
    %1442 = vmatpush2.bf16.msra.mxu0 0
    %1443 = vmatprep.subr.bf16.mxu0 0
    %1444 = vmatpush2.bf16.msra.mxu0 0
    %1445 = vmatprep.subr.bf16.mxu0 0
    %1446 = vmatpush2.bf16.msra.mxu0 0
    %1447 = vmatprep.subr.bf16.mxu0 0
    %1448 = vmatpush2.bf16.msra.mxu0 0
    %1449 = vmatprep.subr.bf16.mxu0 0
    %1450 = vmatpush2.bf16.msra.mxu0 0
    %1451 = vmatprep.subr.bf16.mxu0 0
    %1452 = vmatpush2.bf16.msra.mxu0 0
    %1453 = vmatprep.subr.bf16.mxu0 0
    %1454 = vmatpush2.bf16.msra.mxu0 0
    %1455 = vmatprep.subr.bf16.mxu0 0
    %1456 = vmatpush2.bf16.msra.mxu0 0
    %1457 = vmatprep.mubr.bf16.mxu0 0
    %1458 = vmatmul.mubr.bf16.gmra.mxu0 %v1383
    %v1459 = vpop.f32.mrf.mxu0
    %v1460 = vadd.f32 0.0, %v1459
    %v1461 = vpop.f32.mrf.mxu0
    %v1462 = vpop.f32.mrf.mxu0
    %v1463 = vpop.f32.mrf.mxu0
    %1464 = vdwg.mxu0
    %v1465 = vadd.f32 %v371, %v1419
    %v1466 = vxor.u32 %v1465, 2147483648
    %v1467 = vmul.f32 %v1466, 1.442695
    %v1468 = vpow.pop %v1467
    %v1469 = vadd.f32 %v1468, 1.0
    %v1470 = vrcp.pop %v1469
    %v1471 = vmul.f32 1.0, %v1470
    %v1472 = vadd.f32 %v372, %v1421
    %v1473 = vxor.u32 %v1472, 2147483648
    %v1474 = vmul.f32 %v1473, 1.442695
    %v1475 = vpow.pop %v1474
    %v1476 = vadd.f32 %v1475, 1.0
    %v1477 = vrcp.pop %v1476
    %v1478 = vmul.f32 1.0, %v1477
    %v1479 = vadd.f32 %v1460, %v420
    %v1480 = vmul.f32 %v1471, %v1479
    %v1481 = vadd.f32 %v373, %v1480
    %v1482 = vtanh.pop %v1481
    %v1483 = vsub.f32 1.0, %v1478
    %v1484 = vmul.f32 %v1483, %v1482
    %v1485 = vmul.f32 %v1478, %v1382
    %v1486 = vadd.f32 %v1484, %v1485
    %v1487 = vpack.c.bf16 %v1486, %v1486
    %1488 = vmatprep.subr.bf16.mxu0 %v526
    %1489 = vmatpush1.bf16.msra.mxu0 %v525
    %1490 = vmatprep.subr.bf16.mxu0 %v523
    %1491 = vmatpush1.bf16.msra.mxu0 %v522
    %1492 = vmatprep.subr.bf16.mxu0 %v520
    %1493 = vmatpush1.bf16.msra.mxu0 %v519
    %1494 = vmatprep.subr.bf16.mxu0 %v517
    %1495 = vmatpush1.bf16.msra.mxu0 %v516
    %1496 = vmatprep.subr.bf16.mxu0 %v514
    %1497 = vmatpush1.bf16.msra.mxu0 %v513
    %1498 = vmatprep.subr.bf16.mxu0 %v511
    %1499 = vmatpush1.bf16.msra.mxu0 %v510
    %1500 = vmatprep.subr.bf16.mxu0 %v508
    %1501 = vmatpush1.bf16.msra.mxu0 %v507
    %1502 = vmatprep.subr.bf16.mxu0 %v505
    %1503 = vmatpush1.bf16.msra.mxu0 %v504
    %1504 = vmatprep.subr.bf16.mxu0 0
    %1505 = vmatpush2.bf16.msra.mxu0 0
    %1506 = vmatprep.subr.bf16.mxu0 0
    %1507 = vmatpush2.bf16.msra.mxu0 0
    %1508 = vmatprep.subr.bf16.mxu0 0
    %1509 = vmatpush2.bf16.msra.mxu0 0
    %1510 = vmatprep.subr.bf16.mxu0 0
    %1511 = vmatpush2.bf16.msra.mxu0 0
    %1512 = vmatprep.subr.bf16.mxu0 0
    %1513 = vmatpush2.bf16.msra.mxu0 0
    %1514 = vmatprep.subr.bf16.mxu0 0
    %1515 = vmatpush2.bf16.msra.mxu0 0
    %1516 = vmatprep.subr.bf16.mxu0 0
    %1517 = vmatpush2.bf16.msra.mxu0 0
    %1518 = vmatprep.subr.bf16.mxu0 0
    %1519 = vmatpush2.bf16.msra.mxu0 0
    %1520 = vmatprep.mubr.bf16.mxu0 0
    %1521 = vmatmul.mubr.bf16.gmra.mxu0 %v1487
    %v1522 = vpop.f32.mrf.mxu0
    %v1523 = vadd.f32 0.0, %v1522
    %v1524 = vpop.f32.mrf.mxu0
    %v1525 = vadd.f32 0.0, %v1524
    %v1526 = vpop.f32.mrf.mxu0
    %v1527 = vpop.f32.mrf.mxu0
    %1528 = vdwg.mxu0
    %1529 = vmatprep.subr.bf16.mxu0 0
    %1530 = vmatpush1.bf16.msra.mxu0 %v527
    %1531 = vmatprep.subr.bf16.mxu0 0
    %1532 = vmatpush1.bf16.msra.mxu0 %v524
    %1533 = vmatprep.subr.bf16.mxu0 0
    %1534 = vmatpush1.bf16.msra.mxu0 %v521
    %1535 = vmatprep.subr.bf16.mxu0 0
    %1536 = vmatpush1.bf16.msra.mxu0 %v518
    %1537 = vmatprep.subr.bf16.mxu0 0
    %1538 = vmatpush1.bf16.msra.mxu0 %v515
    %1539 = vmatprep.subr.bf16.mxu0 0
    %1540 = vmatpush1.bf16.msra.mxu0 %v512
    %1541 = vmatprep.subr.bf16.mxu0 0
    %1542 = vmatpush1.bf16.msra.mxu0 %v509
    %1543 = vmatprep.subr.bf16.mxu0 0
    %1544 = vmatpush1.bf16.msra.mxu0 %v506
    %1545 = vmatprep.subr.bf16.mxu0 0
    %1546 = vmatpush2.bf16.msra.mxu0 0
    %1547 = vmatprep.subr.bf16.mxu0 0
    %1548 = vmatpush2.bf16.msra.mxu0 0
    %1549 = vmatprep.subr.bf16.mxu0 0
    %1550 = vmatpush2.bf16.msra.mxu0 0
    %1551 = vmatprep.subr.bf16.mxu0 0
    %1552 = vmatpush2.bf16.msra.mxu0 0
    %1553 = vmatprep.subr.bf16.mxu0 0
    %1554 = vmatpush2.bf16.msra.mxu0 0
    %1555 = vmatprep.subr.bf16.mxu0 0
    %1556 = vmatpush2.bf16.msra.mxu0 0
    %1557 = vmatprep.subr.bf16.mxu0 0
    %1558 = vmatpush2.bf16.msra.mxu0 0
    %1559 = vmatprep.subr.bf16.mxu0 0
    %1560 = vmatpush2.bf16.msra.mxu0 0
    %1561 = vmatprep.mubr.bf16.mxu0 0
    %1562 = vmatmul.mubr.bf16.gmra.mxu0 %v1487
    %v1563 = vpop.f32.mrf.mxu0
    %v1564 = vadd.f32 0.0, %v1563
    %v1565 = vpop.f32.mrf.mxu0
    %v1566 = vpop.f32.mrf.mxu0
    %v1567 = vpop.f32.mrf.mxu0
    %1568 = vdwg.mxu0
    %v1569 = vadd.f32 %v374, %v1523
    %v1570 = vxor.u32 %v1569, 2147483648
    %v1571 = vmul.f32 %v1570, 1.442695
    %v1572 = vpow.pop %v1571
    %v1573 = vadd.f32 %v1572, 1.0
    %v1574 = vrcp.pop %v1573
    %v1575 = vmul.f32 1.0, %v1574
    %v1576 = vadd.f32 %v375, %v1525
    %v1577 = vxor.u32 %v1576, 2147483648
    %v1578 = vmul.f32 %v1577, 1.442695
    %v1579 = vpow.pop %v1578
    %v1580 = vadd.f32 %v1579, 1.0
    %v1581 = vrcp.pop %v1580
    %v1582 = vmul.f32 1.0, %v1581
    %v1583 = vadd.f32 %v1564, %v420
    %v1584 = vmul.f32 %v1575, %v1583
    %v1585 = vadd.f32 %v376, %v1584
    %v1586 = vtanh.pop %v1585
    %v1587 = vsub.f32 1.0, %v1582
    %v1588 = vmul.f32 %v1587, %v1586
    %v1589 = vmul.f32 %v1582, %v1486
    %v1590 = vadd.f32 %v1588, %v1589
    %v1591 = vpack.c.bf16 %v1590, %v1590
    %1592 = vmatprep.subr.bf16.mxu0 %v526
    %1593 = vmatpush1.bf16.msra.mxu0 %v525
    %1594 = vmatprep.subr.bf16.mxu0 %v523
    %1595 = vmatpush1.bf16.msra.mxu0 %v522
    %1596 = vmatprep.subr.bf16.mxu0 %v520
    %1597 = vmatpush1.bf16.msra.mxu0 %v519
    %1598 = vmatprep.subr.bf16.mxu0 %v517
    %1599 = vmatpush1.bf16.msra.mxu0 %v516
    %1600 = vmatprep.subr.bf16.mxu0 %v514
    %1601 = vmatpush1.bf16.msra.mxu0 %v513
    %1602 = vmatprep.subr.bf16.mxu0 %v511
    %1603 = vmatpush1.bf16.msra.mxu0 %v510
    %1604 = vmatprep.subr.bf16.mxu0 %v508
    %1605 = vmatpush1.bf16.msra.mxu0 %v507
    %1606 = vmatprep.subr.bf16.mxu0 %v505
    %1607 = vmatpush1.bf16.msra.mxu0 %v504
    %1608 = vmatprep.subr.bf16.mxu0 0
    %1609 = vmatpush2.bf16.msra.mxu0 0
    %1610 = vmatprep.subr.bf16.mxu0 0
    %1611 = vmatpush2.bf16.msra.mxu0 0
    %1612 = vmatprep.subr.bf16.mxu0 0
    %1613 = vmatpush2.bf16.msra.mxu0 0
    %1614 = vmatprep.subr.bf16.mxu0 0
    %1615 = vmatpush2.bf16.msra.mxu0 0
    %1616 = vmatprep.subr.bf16.mxu0 0
    %1617 = vmatpush2.bf16.msra.mxu0 0
    %1618 = vmatprep.subr.bf16.mxu0 0
    %1619 = vmatpush2.bf16.msra.mxu0 0
    %1620 = vmatprep.subr.bf16.mxu0 0
    %1621 = vmatpush2.bf16.msra.mxu0 0
    %1622 = vmatprep.subr.bf16.mxu0 0
    %1623 = vmatpush2.bf16.msra.mxu0 0
    %1624 = vmatprep.mubr.bf16.mxu0 0
    %1625 = vmatmul.mubr.bf16.gmra.mxu0 %v1591
    %v1626 = vpop.f32.mrf.mxu0
    %v1627 = vadd.f32 0.0, %v1626
    %v1628 = vpop.f32.mrf.mxu0
    %v1629 = vadd.f32 0.0, %v1628
    %v1630 = vpop.f32.mrf.mxu0
    %v1631 = vpop.f32.mrf.mxu0
    %1632 = vdwg.mxu0
    %1633 = vmatprep.subr.bf16.mxu0 0
    %1634 = vmatpush1.bf16.msra.mxu0 %v527
    %1635 = vmatprep.subr.bf16.mxu0 0
    %1636 = vmatpush1.bf16.msra.mxu0 %v524
    %1637 = vmatprep.subr.bf16.mxu0 0
    %1638 = vmatpush1.bf16.msra.mxu0 %v521
    %1639 = vmatprep.subr.bf16.mxu0 0
    %1640 = vmatpush1.bf16.msra.mxu0 %v518
    %1641 = vmatprep.subr.bf16.mxu0 0
    %1642 = vmatpush1.bf16.msra.mxu0 %v515
    %1643 = vmatprep.subr.bf16.mxu0 0
    %1644 = vmatpush1.bf16.msra.mxu0 %v512
    %1645 = vmatprep.subr.bf16.mxu0 0
    %1646 = vmatpush1.bf16.msra.mxu0 %v509
    %1647 = vmatprep.subr.bf16.mxu0 0
    %1648 = vmatpush1.bf16.msra.mxu0 %v506
    %1649 = vmatprep.subr.bf16.mxu0 0
    %1650 = vmatpush2.bf16.msra.mxu0 0
    %1651 = vmatprep.subr.bf16.mxu0 0
    %1652 = vmatpush2.bf16.msra.mxu0 0
    %1653 = vmatprep.subr.bf16.mxu0 0
    %1654 = vmatpush2.bf16.msra.mxu0 0
    %1655 = vmatprep.subr.bf16.mxu0 0
    %1656 = vmatpush2.bf16.msra.mxu0 0
    %1657 = vmatprep.subr.bf16.mxu0 0
    %1658 = vmatpush2.bf16.msra.mxu0 0
    %1659 = vmatprep.subr.bf16.mxu0 0
    %1660 = vmatpush2.bf16.msra.mxu0 0
    %1661 = vmatprep.subr.bf16.mxu0 0
    %1662 = vmatpush2.bf16.msra.mxu0 0
    %1663 = vmatprep.subr.bf16.mxu0 0
    %1664 = vmatpush2.bf16.msra.mxu0 0
    %1665 = vmatprep.mubr.bf16.mxu0 0
    %1666 = vmatmul.mubr.bf16.gmra.mxu0 %v1591
    %v1667 = vpop.f32.mrf.mxu0
    %v1668 = vadd.f32 0.0, %v1667
    %v1669 = vpop.f32.mrf.mxu0
    %v1670 = vpop.f32.mrf.mxu0
    %v1671 = vpop.f32.mrf.mxu0
    %1672 = vdwg.mxu0
    %v1673 = vadd.f32 %v377, %v1627
    %v1674 = vxor.u32 %v1673, 2147483648
    %v1675 = vmul.f32 %v1674, 1.442695
    %v1676 = vpow.pop %v1675
    %v1677 = vadd.f32 %v1676, 1.0
    %v1678 = vrcp.pop %v1677
    %v1679 = vmul.f32 1.0, %v1678
    %v1680 = vadd.f32 %v378, %v1629
    %v1681 = vxor.u32 %v1680, 2147483648
    %v1682 = vmul.f32 %v1681, 1.442695
    %v1683 = vpow.pop %v1682
    %v1684 = vadd.f32 %v1683, 1.0
    %v1685 = vrcp.pop %v1684
    %v1686 = vmul.f32 1.0, %v1685
    %v1687 = vadd.f32 %v1668, %v420
    %v1688 = vmul.f32 %v1679, %v1687
    %v1689 = vadd.f32 %v379, %v1688
    %v1690 = vtanh.pop %v1689
    %v1691 = vsub.f32 1.0, %v1686
    %v1692 = vmul.f32 %v1691, %v1690
    %v1693 = vmul.f32 %v1686, %v1590
    %v1694 = vadd.f32 %v1692, %v1693
    %v1695 = vpack.c.bf16 %v1694, %v1694
    %1696 = vmatprep.subr.bf16.mxu0 %v526
    %1697 = vmatpush1.bf16.msra.mxu0 %v525
    %1698 = vmatprep.subr.bf16.mxu0 %v523
    %1699 = vmatpush1.bf16.msra.mxu0 %v522
    %1700 = vmatprep.subr.bf16.mxu0 %v520
    %1701 = vmatpush1.bf16.msra.mxu0 %v519
    %1702 = vmatprep.subr.bf16.mxu0 %v517
    %1703 = vmatpush1.bf16.msra.mxu0 %v516
    %1704 = vmatprep.subr.bf16.mxu0 %v514
    %1705 = vmatpush1.bf16.msra.mxu0 %v513
    %1706 = vmatprep.subr.bf16.mxu0 %v511
    %1707 = vmatpush1.bf16.msra.mxu0 %v510
    %1708 = vmatprep.subr.bf16.mxu0 %v508
    %1709 = vmatpush1.bf16.msra.mxu0 %v507
    %1710 = vmatprep.subr.bf16.mxu0 %v505
    %1711 = vmatpush1.bf16.msra.mxu0 %v504
    %1712 = vmatprep.subr.bf16.mxu0 0
    %1713 = vmatpush2.bf16.msra.mxu0 0
    %1714 = vmatprep.subr.bf16.mxu0 0
    %1715 = vmatpush2.bf16.msra.mxu0 0
    %1716 = vmatprep.subr.bf16.mxu0 0
    %1717 = vmatpush2.bf16.msra.mxu0 0
    %1718 = vmatprep.subr.bf16.mxu0 0
    %1719 = vmatpush2.bf16.msra.mxu0 0
    %1720 = vmatprep.subr.bf16.mxu0 0
    %1721 = vmatpush2.bf16.msra.mxu0 0
    %1722 = vmatprep.subr.bf16.mxu0 0
    %1723 = vmatpush2.bf16.msra.mxu0 0
    %1724 = vmatprep.subr.bf16.mxu0 0
    %1725 = vmatpush2.bf16.msra.mxu0 0
    %1726 = vmatprep.subr.bf16.mxu0 0
    %1727 = vmatpush2.bf16.msra.mxu0 0
    %1728 = vmatprep.mubr.bf16.mxu0 0
    %1729 = vmatmul.mubr.bf16.gmra.mxu0 %v1695
    %v1730 = vpop.f32.mrf.mxu0
    %v1731 = vadd.f32 0.0, %v1730
    %v1732 = vpop.f32.mrf.mxu0
    %v1733 = vadd.f32 0.0, %v1732
    %v1734 = vpop.f32.mrf.mxu0
    %v1735 = vpop.f32.mrf.mxu0
    %1736 = vdwg.mxu0
    %1737 = vmatprep.subr.bf16.mxu0 0
    %1738 = vmatpush1.bf16.msra.mxu0 %v527
    %1739 = vmatprep.subr.bf16.mxu0 0
    %1740 = vmatpush1.bf16.msra.mxu0 %v524
    %1741 = vmatprep.subr.bf16.mxu0 0
    %1742 = vmatpush1.bf16.msra.mxu0 %v521
    %1743 = vmatprep.subr.bf16.mxu0 0
    %1744 = vmatpush1.bf16.msra.mxu0 %v518
    %1745 = vmatprep.subr.bf16.mxu0 0
    %1746 = vmatpush1.bf16.msra.mxu0 %v515
    %1747 = vmatprep.subr.bf16.mxu0 0
    %1748 = vmatpush1.bf16.msra.mxu0 %v512
    %1749 = vmatprep.subr.bf16.mxu0 0
    %1750 = vmatpush1.bf16.msra.mxu0 %v509
    %1751 = vmatprep.subr.bf16.mxu0 0
    %1752 = vmatpush1.bf16.msra.mxu0 %v506
    %1753 = vmatprep.subr.bf16.mxu0 0
    %1754 = vmatpush2.bf16.msra.mxu0 0
    %1755 = vmatprep.subr.bf16.mxu0 0
    %1756 = vmatpush2.bf16.msra.mxu0 0
    %1757 = vmatprep.subr.bf16.mxu0 0
    %1758 = vmatpush2.bf16.msra.mxu0 0
    %1759 = vmatprep.subr.bf16.mxu0 0
    %1760 = vmatpush2.bf16.msra.mxu0 0
    %1761 = vmatprep.subr.bf16.mxu0 0
    %1762 = vmatpush2.bf16.msra.mxu0 0
    %1763 = vmatprep.subr.bf16.mxu0 0
    %1764 = vmatpush2.bf16.msra.mxu0 0
    %1765 = vmatprep.subr.bf16.mxu0 0
    %1766 = vmatpush2.bf16.msra.mxu0 0
    %1767 = vmatprep.subr.bf16.mxu0 0
    %1768 = vmatpush2.bf16.msra.mxu0 0
    %1769 = vmatprep.mubr.bf16.mxu0 0
    %1770 = vmatmul.mubr.bf16.gmra.mxu0 %v1695
    %v1771 = vpop.f32.mrf.mxu0
    %v1772 = vadd.f32 0.0, %v1771
    %v1773 = vpop.f32.mrf.mxu0
    %v1774 = vpop.f32.mrf.mxu0
    %v1775 = vpop.f32.mrf.mxu0
    %1776 = vdwg.mxu0
    %v1777 = vadd.f32 %v380, %v1731
    %v1778 = vxor.u32 %v1777, 2147483648
    %v1779 = vmul.f32 %v1778, 1.442695
    %v1780 = vpow.pop %v1779
    %v1781 = vadd.f32 %v1780, 1.0
    %v1782 = vrcp.pop %v1781
    %v1783 = vmul.f32 1.0, %v1782
    %v1784 = vadd.f32 %v381, %v1733
    %v1785 = vxor.u32 %v1784, 2147483648
    %v1786 = vmul.f32 %v1785, 1.442695
    %v1787 = vpow.pop %v1786
    %v1788 = vadd.f32 %v1787, 1.0
    %v1789 = vrcp.pop %v1788
    %v1790 = vmul.f32 1.0, %v1789
    %v1791 = vadd.f32 %v1772, %v420
    %v1792 = vmul.f32 %v1783, %v1791
    %v1793 = vadd.f32 %v382, %v1792
    %v1794 = vtanh.pop %v1793
    %v1795 = vsub.f32 1.0, %v1790
    %v1796 = vmul.f32 %v1795, %v1794
    %v1797 = vmul.f32 %v1790, %v1694
    %v1798 = vadd.f32 %v1796, %v1797
    %v1799 = vld [vmem:[%s6] sm:$0x1]
    %v1801 = vlaneseq
    %v1802 = vshrl.u32 %v1801, 7
    %v1803 = vsub.s32 0, %v1802
    %v1804 = vrot.slane %v1799, %v1803
    %v1806 = vmul.f32 %v1798, %v1804
    %1807 = vadd.xlane.f32.xlu0 %v1806
    %v1808 = vpop.xlane.xlu0 %1807
    %v1809 = vld [vmem:[#allocation2] sm:$0x1]
    %v1811 = vlaneseq
    %v1812 = vshrl.u32 %v1811, 7
    %v1813 = vsub.s32 0, %v1812
    %v1814 = vrot.slane %v1809, %v1813
    %v1816 = vadd.f32 %v1808, %v1814
    %v1817 = vxor.u32 %v1816, 2147483648
    %v1818 = vmul.f32 %v1817, 1.442695
    %v1819 = vpow.pop %v1818
    %v1820 = vadd.f32 %v1819, 1.0
    %v1821 = vrcp.pop %v1820
    %v1822 = vmul.f32 1.0, %v1821
    %vm1823 = vcmask 7168
    %1824 = vst.msk [vmem:[%s8] sm:$0xff] %vm1823, %v1822
    // Predicated region
    $region38: #{tpu_custom_call.1} parent=1 // pred_check
      _
    $region39: #{tpu_custom_call.1} parent=1 // pred_check_branch
      %1826 = sbr.rel (0) target = $region41
    $region40: #{tpu_custom_call.1} parent=1 // pred_region
      _
    $region41: #{tpu_custom_call.1} parent=1 // pred_fallthru
      _
    // Predicated region
    $region42: #{tpu_custom_call.1} parent=1 // pred_check
      _
    $region43: #{tpu_custom_call.1} parent=1 // pred_check_branch
      %1828 = sbr.rel (0) target = $region45
    $region44: #{tpu_custom_call.1} parent=1 // pred_region
      _
    $region45: #{tpu_custom_call.1} parent=1 // pred_fallthru
      _
    %1829 = vsyncpa [#allocation4], 1

</llo_original>
